<compile_context>
chip_gen: v6e
topology: v6e:2x2x1
jax: 0.10.0
libtpu: 0.0.40
codegen_flags: <defaults>
</compile_context>

<pallas_src>
import math

import jax
import jax.numpy as jnp
from jax import lax
from jax.experimental import pallas as pl
from jax.experimental.pallas import tpu as pltpu

NUM_HEADS = 4
_NEG_INF = -1e30


def _round_up(x, m):
    return (x + m - 1) // m * m


def _fusion_kernel(audio_ref, text_ref, mask_ref,
                   wq_ref, bq_ref, wk_ref, bk_ref, wv_ref, bv_ref,
                   wot_ref, bo_ref, out_ref):
    B, Sq, Da = audio_ref.shape
    _, Sk, Dt = text_ref.shape
    H = wq_ref.shape[0]
    E = wot_ref.shape[0]

    # Flatten (batch, seq) into the sublane axis once.  Sq/Sk are padded to
    # multiples of 8 by the wrapper, so these reshapes are tile-aligned.
    audio = audio_ref[...].reshape(B * Sq, Da)
    text = text_ref[...].reshape(B * Sk, Dt)
    mask = mask_ref[...]          # (B*Sq, B*Sk) additive: 0 keep, -1e30 drop

    head_outs = []
    for h in range(H):            # static unroll over 4 heads; weight "slices"
                                  # are free leading-dim indexes (head-major refs)
        q_h = jnp.dot(audio, wq_ref[h], preferred_element_type=jnp.float32) + bq_ref[h]
        k_h = jnp.dot(text, wk_ref[h], preferred_element_type=jnp.float32) + bk_ref[h]
        v_h = jnp.dot(text, wv_ref[h], preferred_element_type=jnp.float32) + bv_ref[h]
        # scores = q_h @ k_h^T (contract last dims, no explicit transpose); one
        # MXU push covers both batch elements; cross-batch / padded keys masked.
        s = lax.dot_general(q_h, k_h, (((1,), (1,)), ((), ())),
                            preferred_element_type=jnp.float32) + mask
        s = s - jnp.max(s, axis=-1, keepdims=True)
        p = jnp.exp(s)
        p = p * pl.reciprocal(jnp.sum(p, axis=-1, keepdims=True), approx=False)
        head_outs.append(jnp.dot(p, v_h, preferred_element_type=jnp.float32))  # (B*Sq, hd)

    # One lane concat, then a single K=E out-projection matmul (replaces four
    # K=hd pushes); bias added once; single full-block store.
    o = jnp.concatenate(head_outs, axis=-1)                                 # (B*Sq, E)
    out = jnp.dot(o, wot_ref[...], preferred_element_type=jnp.float32) + bo_ref[...]
    out_ref[...] = out.reshape(B, Sq, E).astype(out_ref.dtype)


def _make_attention_mask(B, sq_pad, sk_pad, sk_valid):
    """Additive mask over the flattened (B*Sq_pad, B*Sk_pad) score plane:
    0 where query and key belong to the same batch element AND the key is a
    real (non-padded) position, -1e30 elsewhere."""
    q_batch = jnp.arange(B * sq_pad) // sq_pad
    k_batch = jnp.arange(B * sk_pad) // sk_pad
    k_valid = (jnp.arange(B * sk_pad) % sk_pad) < sk_valid
    keep = (q_batch[:, None] == k_batch[None, :]) & k_valid[None, :]
    return jnp.where(keep, 0.0, _NEG_INF).astype(jnp.float32)


def cross_attention_fusion(audio, text, params):
    """audio: (B, Sq, audio_dim), text: (B, Sk, text_dim) -> (B, Sq, fusion_dim)."""
    B, Sq, Da = audio.shape
    _, Sk, Dt = text.shape
    H, _, hd = params["wq_h"].shape
    E = H * hd

    # Pad seq dims to sublane multiples so in-kernel reshapes are tile-aligned.
    sq_pad = _round_up(Sq, 8)
    sk_pad = _round_up(Sk, 8)
    if sq_pad != Sq:
        audio = jnp.pad(audio, ((0, 0), (0, sq_pad - Sq), (0, 0)))
    if sk_pad != Sk:
        text = jnp.pad(text, ((0, 0), (0, sk_pad - Sk), (0, 0)))

    mask = _make_attention_mask(B, sq_pad, sk_pad, Sk)

    inputs = (audio, text, mask,
              params["wq_h"], params["bq_h"],
              params["wk_h"], params["bk_h"],
              params["wv_h"], params["bv_h"],
              params["wot"], params["bo"])

    rows_q, rows_k = B * sq_pad, B * sk_pad
    flops = (2 * rows_q * Da * E               # Q projection
             + 2 * 2 * rows_k * Dt * E         # K and V projections
             + 2 * 2 * rows_q * rows_k * E     # scores + P@V (all heads)
             + 2 * rows_q * E * E)             # out projection
    transcendentals = H * rows_q * rows_k      # exp
    bytes_accessed = 4 * (sum(int(x.size) for x in inputs) + rows_q * E)

    vmem_spec = pl.BlockSpec(memory_space=pltpu.MemorySpace.VMEM)
    out = pl.pallas_call(
        _fusion_kernel,
        out_shape=jax.ShapeDtypeStruct((B, sq_pad, E), jnp.float32),
        in_specs=[vmem_spec] * len(inputs),
        out_specs=vmem_spec,
        compiler_params=pltpu.CompilerParams(vmem_limit_bytes=32 * 1024 * 1024),
        cost_estimate=pl.CostEstimate(flops=int(flops),
                                      transcendentals=int(transcendentals),
                                      bytes_accessed=int(bytes_accessed)),
    )(*inputs)

    return out[:, :Sq, :] if sq_pad != Sq else out


def init_raw_params(key, audio_dim, text_dim, fusion_dim):
    """Deterministic synthetic parameters matching the PyTorch module layout."""
    ks = jax.random.split(key, 8)
    E = fusion_dim

    def lin(k, out_d, in_d):
        bound = 1.0 / math.sqrt(in_d)
        return jax.random.uniform(k, (out_d, in_d), jnp.float32, -bound, bound)

    wa = lin(ks[0], E, audio_dim)
    ba = jax.random.uniform(ks[1], (1, E), jnp.float32,
                            -1 / math.sqrt(audio_dim), 1 / math.sqrt(audio_dim))
    wt = lin(ks[2], E, text_dim)
    bt = jax.random.uniform(ks[3], (1, E), jnp.float32,
                            -1 / math.sqrt(text_dim), 1 / math.sqrt(text_dim))
    w_in = jax.random.uniform(ks[4], (3 * E, E), jnp.float32,
                              -1 / math.sqrt(E), 1 / math.sqrt(E))
    b_in = jnp.zeros((3, E), jnp.float32)      # PyTorch zero-inits in_proj_bias
    wo = lin(ks[5], E, E)
    bo = jnp.zeros((1, E), jnp.float32)        # PyTorch zero-inits out_proj.bias

    return dict(
        wa=wa, ba=ba, wt=wt, bt=bt,
        wq=w_in[0 * E:1 * E], bq=b_in[0:1],
        wk=w_in[1 * E:2 * E], bk=b_in[1:2],
        wv=w_in[2 * E:3 * E], bv=b_in[2:3],
        wo=wo, bo=bo,
    )


def compose_params(p, num_heads=NUM_HEADS):
    """One-time host-side weight pre-transposition, algebraic composition and
    head-major re-layout (all in f32; cast AFTER composing if bf16 is wanted)."""
    E = p["wq"].shape[0]
    hd = E // num_heads
    scale = 1.0 / math.sqrt(hd)

    wqt = (p["wa"].T @ p["wq"].T) * scale                  # (Da, E), pre-scaled
    bq = (p["ba"] @ p["wq"].T + p["bq"]) * scale           # (1, E)
    wkt = p["wt"].T @ p["wk"].T                            # (Dt, E)
    bk = p["bt"] @ p["wk"].T + p["bk"]
    wvt = p["wt"].T @ p["wv"].T                            # (Dt, E)
    bv = p["bt"] @ p["wv"].T + p["bv"]

    def head_major_w(w):      # (D, E) -> (H, D, hd)
        D = w.shape[0]
        return jnp.transpose(w.reshape(D, num_heads, hd), (1, 0, 2))

    def head_major_b(b):      # (1, E) -> (H, 1, hd)
        return jnp.transpose(b.reshape(1, num_heads, hd), (1, 0, 2))

    return dict(
        wq_h=head_major_w(wqt), bq_h=head_major_b(bq),
        wk_h=head_major_w(wkt), bk_h=head_major_b(bk),
        wv_h=head_major_w(wvt), bv_h=head_major_b(bv),
        wot=p["wo"].T,                                     # (E, E)
        bo=p["bo"],                                        # (1, E)
    )


def reference(audio, text, p):
    """Pure-JAX reference reproducing the PyTorch module semantics (raw weights)."""
    a = audio @ p["wa"].T + p["ba"]
    t = text @ p["wt"].T + p["bt"]
    q = a @ p["wq"].T + p["bq"]
    k = t @ p["wk"].T + p["bk"]
    v = t @ p["wv"].T + p["bv"]
    B, Sq, E = q.shape
    Sk = k.shape[1]
    hd = E // NUM_HEADS
    qh = q.reshape(B, Sq, NUM_HEADS, hd).transpose(0, 2, 1, 3)
    kh = k.reshape(B, Sk, NUM_HEADS, hd).transpose(0, 2, 1, 3)
    vh = v.reshape(B, Sk, NUM_HEADS, hd).transpose(0, 2, 1, 3)
    scores = jnp.einsum("bhqd,bhkd->bhqk", qh, kh) / math.sqrt(hd)
    p_attn = jax.nn.softmax(scores, axis=-1)
    o = jnp.einsum("bhqk,bhkd->bhqd", p_attn, vh).transpose(0, 2, 1, 3).reshape(B, Sq, E)
    return o @ p["wo"].T + p["bo"]


if __name__ == "__main__":
    B, Sq, Sk = 2, 8, 12
    audio_dim, text_dim, fusion_dim = 24, 16, 32

    key = jax.random.PRNGKey(0)
    k_a, k_t, k_p = jax.random.split(key, 3)
    audio = jax.random.normal(k_a, (B, Sq, audio_dim), jnp.float32)
    text = jax.random.normal(k_t, (B, Sk, text_dim), jnp.float32)

    raw = init_raw_params(k_p, audio_dim, text_dim, fusion_dim)
    params = compose_params(raw)

    out = cross_attention_fusion(audio, text, params)
    out = jax.block_until_ready(out)

    ref = reference(audio, text, raw)
    assert out.shape == (B, Sq, fusion_dim)
    # Exact reciprocal restored -> tight tolerance again (only fp32 association
    # differences from the host-side weight composition remain).
    err = float(jnp.max(jnp.abs(out - ref)))
    assert jnp.allclose(out, ref, atol=1e-4, rtol=1e-4), err
    print("KERNEL_OK")
</pallas_src>

<mosaic_0001>
module attributes {stable_mosaic.version = 11 : i64} {
  func.func @_fusion_kernel(%arg0: memref<2x8x24xf32, #tpu.memory_space<vmem>>, %arg1: memref<2x16x16xf32, #tpu.memory_space<vmem>>, %arg2: memref<16x32xf32, #tpu.memory_space<vmem>>, %arg3: memref<4x24x8xf32, #tpu.memory_space<vmem>>, %arg4: memref<4x1x8xf32, #tpu.memory_space<vmem>>, %arg5: memref<4x16x8xf32, #tpu.memory_space<vmem>>, %arg6: memref<4x1x8xf32, #tpu.memory_space<vmem>>, %arg7: memref<4x16x8xf32, #tpu.memory_space<vmem>>, %arg8: memref<4x1x8xf32, #tpu.memory_space<vmem>>, %arg9: memref<32x32xf32, #tpu.memory_space<vmem>>, %arg10: memref<1x32xf32, #tpu.memory_space<vmem>>, %arg11: memref<2x8x32xf32, #tpu.memory_space<vmem>>) attributes {dimension_semantics = [], scalar_prefetch = 0 : i64, scratch_operands = 0 : i64, tpu.core_type = #tpu.core_type<tc>} {
    %c0 = arith.constant 0 : index
    %c0_0 = arith.constant 0 : index
    %c0_1 = arith.constant 0 : index
    %0 = vector.load %arg0[%c0, %c0_0, %c0_1] : memref<2x8x24xf32, #tpu.memory_space<vmem>>, vector<2x8x24xf32>
    %1 = vector.shape_cast %0 : vector<2x8x24xf32> to vector<16x24xf32>
    %c0_2 = arith.constant 0 : index
    %c0_3 = arith.constant 0 : index
    %c0_4 = arith.constant 0 : index
    %2 = vector.load %arg1[%c0_2, %c0_3, %c0_4] : memref<2x16x16xf32, #tpu.memory_space<vmem>>, vector<2x16x16xf32>
    %3 = vector.shape_cast %2 : vector<2x16x16xf32> to vector<32x16xf32>
    %c0_5 = arith.constant 0 : index
    %c0_6 = arith.constant 0 : index
    %4 = vector.load %arg2[%c0_5, %c0_6] : memref<16x32xf32, #tpu.memory_space<vmem>>, vector<16x32xf32>
    %c0_7 = arith.constant 0 : index
    %c0_8 = arith.constant 0 : index
    %c0_9 = arith.constant 0 : index
    %5 = vector.load %arg3[%c0_7, %c0_8, %c0_9] : memref<4x24x8xf32, #tpu.memory_space<vmem>>, vector<1x24x8xf32>
    %6 = vector.shape_cast %5 : vector<1x24x8xf32> to vector<24x8xf32>
    %cst = arith.constant dense<0.000000e+00> : vector<16x8xf32>
    %7 = tpu.matmul %1, %6, %cst {dimension_numbers = #tpu.dot_dimension_numbers<[1], [0], [0], [1], [0, 0, 1, 1], [], []>} : vector<16x24xf32>, vector<24x8xf32>, vector<16x8xf32> -> vector<16x8xf32>
    %c0_10 = arith.constant 0 : index
    %c0_11 = arith.constant 0 : index
    %c0_12 = arith.constant 0 : index
    %8 = vector.load %arg4[%c0_10, %c0_11, %c0_12] : memref<4x1x8xf32, #tpu.memory_space<vmem>>, vector<1x1x8xf32>
    %9 = vector.shape_cast %8 : vector<1x1x8xf32> to vector<1x8xf32>
    %10 = vector.broadcast %9 : vector<1x8xf32> to vector<16x8xf32>
    %11 = arith.addf %7, %10 : vector<16x8xf32>
    %c0_13 = arith.constant 0 : index
    %c0_14 = arith.constant 0 : index
    %c0_15 = arith.constant 0 : index
    %12 = vector.load %arg5[%c0_13, %c0_14, %c0_15] : memref<4x16x8xf32, #tpu.memory_space<vmem>>, vector<1x16x8xf32>
    %13 = vector.shape_cast %12 : vector<1x16x8xf32> to vector<16x8xf32>
    %cst_16 = arith.constant dense<0.000000e+00> : vector<32x8xf32>
    %14 = tpu.matmul %3, %13, %cst_16 {dimension_numbers = #tpu.dot_dimension_numbers<[1], [0], [0], [1], [0, 0, 1, 1], [], []>} : vector<32x16xf32>, vector<16x8xf32>, vector<32x8xf32> -> vector<32x8xf32>
    %c0_17 = arith.constant 0 : index
    %c0_18 = arith.constant 0 : index
    %c0_19 = arith.constant 0 : index
    %15 = vector.load %arg6[%c0_17, %c0_18, %c0_19] : memref<4x1x8xf32, #tpu.memory_space<vmem>>, vector<1x1x8xf32>
    %16 = vector.shape_cast %15 : vector<1x1x8xf32> to vector<1x8xf32>
    %17 = vector.broadcast %16 : vector<1x8xf32> to vector<32x8xf32>
    %18 = arith.addf %14, %17 : vector<32x8xf32>
    %c0_20 = arith.constant 0 : index
    %c0_21 = arith.constant 0 : index
    %c0_22 = arith.constant 0 : index
    %19 = vector.load %arg7[%c0_20, %c0_21, %c0_22] : memref<4x16x8xf32, #tpu.memory_space<vmem>>, vector<1x16x8xf32>
    %20 = vector.shape_cast %19 : vector<1x16x8xf32> to vector<16x8xf32>
    %cst_23 = arith.constant dense<0.000000e+00> : vector<32x8xf32>
    %21 = tpu.matmul %3, %20, %cst_23 {dimension_numbers = #tpu.dot_dimension_numbers<[1], [0], [0], [1], [0, 0, 1, 1], [], []>} : vector<32x16xf32>, vector<16x8xf32>, vector<32x8xf32> -> vector<32x8xf32>
    %c0_24 = arith.constant 0 : index
    %c0_25 = arith.constant 0 : index
    %c0_26 = arith.constant 0 : index
    %22 = vector.load %arg8[%c0_24, %c0_25, %c0_26] : memref<4x1x8xf32, #tpu.memory_space<vmem>>, vector<1x1x8xf32>
    %23 = vector.shape_cast %22 : vector<1x1x8xf32> to vector<1x8xf32>
    %24 = vector.broadcast %23 : vector<1x8xf32> to vector<32x8xf32>
    %25 = arith.addf %21, %24 : vector<32x8xf32>
    %cst_27 = arith.constant dense<0.000000e+00> : vector<16x32xf32>
    %26 = tpu.matmul %11, %18, %cst_27 {dimension_numbers = #tpu.dot_dimension_numbers<[1], [1], [0], [0], [0, 0, 1, 0], [], []>} : vector<16x8xf32>, vector<32x8xf32>, vector<16x32xf32> -> vector<16x32xf32>
    %27 = arith.addf %26, %4 : vector<16x32xf32>
    %cst_28 = arith.constant dense<0xFF800000> : vector<16xf32>
    %28 = vector.multi_reduction <maximumf>, %27, %cst_28 [1] : vector<16x32xf32> to vector<16xf32>
    %29 = vector.shape_cast %28 : vector<16xf32> to vector<16x1xf32>
    %30 = vector.broadcast %29 : vector<16x1xf32> to vector<16x32xf32>
    %31 = arith.subf %27, %30 : vector<16x32xf32>
    %32 = math.exp %31 : vector<16x32xf32>
    %cst_29 = arith.constant dense<0.000000e+00> : vector<16xf32>
    %33 = vector.multi_reduction <add>, %32, %cst_29 [1] : vector<16x32xf32> to vector<16xf32>
    %34 = vector.shape_cast %33 : vector<16xf32> to vector<16x1xf32>
    %35 = tpu.reciprocal %34 : vector<16x1xf32> -> vector<16x1xf32>
    %36 = vector.broadcast %35 : vector<16x1xf32> to vector<16x32xf32>
    %37 = arith.mulf %32, %36 : vector<16x32xf32>
    %cst_30 = arith.constant dense<0.000000e+00> : vector<16x8xf32>
    %38 = tpu.matmul %37, %25, %cst_30 {dimension_numbers = #tpu.dot_dimension_numbers<[1], [0], [0], [1], [0, 0, 1, 1], [], []>} : vector<16x32xf32>, vector<32x8xf32>, vector<16x8xf32> -> vector<16x8xf32>
    %c1 = arith.constant 1 : index
    %c0_31 = arith.constant 0 : index
    %c0_32 = arith.constant 0 : index
    %39 = vector.load %arg3[%c1, %c0_31, %c0_32] : memref<4x24x8xf32, #tpu.memory_space<vmem>>, vector<1x24x8xf32>
    %40 = vector.shape_cast %39 : vector<1x24x8xf32> to vector<24x8xf32>
    %cst_33 = arith.constant dense<0.000000e+00> : vector<16x8xf32>
    %41 = tpu.matmul %1, %40, %cst_33 {dimension_numbers = #tpu.dot_dimension_numbers<[1], [0], [0], [1], [0, 0, 1, 1], [], []>} : vector<16x24xf32>, vector<24x8xf32>, vector<16x8xf32> -> vector<16x8xf32>
    %c1_34 = arith.constant 1 : index
    %c0_35 = arith.constant 0 : index
    %c0_36 = arith.constant 0 : index
    %42 = vector.load %arg4[%c1_34, %c0_35, %c0_36] : memref<4x1x8xf32, #tpu.memory_space<vmem>>, vector<1x1x8xf32>
    %43 = vector.shape_cast %42 : vector<1x1x8xf32> to vector<1x8xf32>
    %44 = vector.broadcast %43 : vector<1x8xf32> to vector<16x8xf32>
    %45 = arith.addf %41, %44 : vector<16x8xf32>
    %c1_37 = arith.constant 1 : index
    %c0_38 = arith.constant 0 : index
    %c0_39 = arith.constant 0 : index
    %46 = vector.load %arg5[%c1_37, %c0_38, %c0_39] : memref<4x16x8xf32, #tpu.memory_space<vmem>>, vector<1x16x8xf32>
    %47 = vector.shape_cast %46 : vector<1x16x8xf32> to vector<16x8xf32>
    %cst_40 = arith.constant dense<0.000000e+00> : vector<32x8xf32>
    %48 = tpu.matmul %3, %47, %cst_40 {dimension_numbers = #tpu.dot_dimension_numbers<[1], [0], [0], [1], [0, 0, 1, 1], [], []>} : vector<32x16xf32>, vector<16x8xf32>, vector<32x8xf32> -> vector<32x8xf32>
    %c1_41 = arith.constant 1 : index
    %c0_42 = arith.constant 0 : index
    %c0_43 = arith.constant 0 : index
    %49 = vector.load %arg6[%c1_41, %c0_42, %c0_43] : memref<4x1x8xf32, #tpu.memory_space<vmem>>, vector<1x1x8xf32>
    %50 = vector.shape_cast %49 : vector<1x1x8xf32> to vector<1x8xf32>
    %51 = vector.broadcast %50 : vector<1x8xf32> to vector<32x8xf32>
    %52 = arith.addf %48, %51 : vector<32x8xf32>
    %c1_44 = arith.constant 1 : index
    %c0_45 = arith.constant 0 : index
    %c0_46 = arith.constant 0 : index
    %53 = vector.load %arg7[%c1_44, %c0_45, %c0_46] : memref<4x16x8xf32, #tpu.memory_space<vmem>>, vector<1x16x8xf32>
    %54 = vector.shape_cast %53 : vector<1x16x8xf32> to vector<16x8xf32>
    %cst_47 = arith.constant dense<0.000000e+00> : vector<32x8xf32>
    %55 = tpu.matmul %3, %54, %cst_47 {dimension_numbers = #tpu.dot_dimension_numbers<[1], [0], [0], [1], [0, 0, 1, 1], [], []>} : vector<32x16xf32>, vector<16x8xf32>, vector<32x8xf32> -> vector<32x8xf32>
    %c1_48 = arith.constant 1 : index
    %c0_49 = arith.constant 0 : index
    %c0_50 = arith.constant 0 : index
    %56 = vector.load %arg8[%c1_48, %c0_49, %c0_50] : memref<4x1x8xf32, #tpu.memory_space<vmem>>, vector<1x1x8xf32>
    %57 = vector.shape_cast %56 : vector<1x1x8xf32> to vector<1x8xf32>
    %58 = vector.broadcast %57 : vector<1x8xf32> to vector<32x8xf32>
    %59 = arith.addf %55, %58 : vector<32x8xf32>
    %cst_51 = arith.constant dense<0.000000e+00> : vector<16x32xf32>
    %60 = tpu.matmul %45, %52, %cst_51 {dimension_numbers = #tpu.dot_dimension_numbers<[1], [1], [0], [0], [0, 0, 1, 0], [], []>} : vector<16x8xf32>, vector<32x8xf32>, vector<16x32xf32> -> vector<16x32xf32>
    %61 = arith.addf %60, %4 : vector<16x32xf32>
    %cst_52 = arith.constant dense<0xFF800000> : vector<16xf32>
    %62 = vector.multi_reduction <maximumf>, %61, %cst_52 [1] : vector<16x32xf32> to vector<16xf32>
    %63 = vector.shape_cast %62 : vector<16xf32> to vector<16x1xf32>
    %64 = vector.broadcast %63 : vector<16x1xf32> to vector<16x32xf32>
    %65 = arith.subf %61, %64 : vector<16x32xf32>
    %66 = math.exp %65 : vector<16x32xf32>
    %cst_53 = arith.constant dense<0.000000e+00> : vector<16xf32>
    %67 = vector.multi_reduction <add>, %66, %cst_53 [1] : vector<16x32xf32> to vector<16xf32>
    %68 = vector.shape_cast %67 : vector<16xf32> to vector<16x1xf32>
    %69 = tpu.reciprocal %68 : vector<16x1xf32> -> vector<16x1xf32>
    %70 = vector.broadcast %69 : vector<16x1xf32> to vector<16x32xf32>
    %71 = arith.mulf %66, %70 : vector<16x32xf32>
    %cst_54 = arith.constant dense<0.000000e+00> : vector<16x8xf32>
    %72 = tpu.matmul %71, %59, %cst_54 {dimension_numbers = #tpu.dot_dimension_numbers<[1], [0], [0], [1], [0, 0, 1, 1], [], []>} : vector<16x32xf32>, vector<32x8xf32>, vector<16x8xf32> -> vector<16x8xf32>
    %c2 = arith.constant 2 : index
    %c0_55 = arith.constant 0 : index
    %c0_56 = arith.constant 0 : index
    %73 = vector.load %arg3[%c2, %c0_55, %c0_56] : memref<4x24x8xf32, #tpu.memory_space<vmem>>, vector<1x24x8xf32>
    %74 = vector.shape_cast %73 : vector<1x24x8xf32> to vector<24x8xf32>
    %cst_57 = arith.constant dense<0.000000e+00> : vector<16x8xf32>
    %75 = tpu.matmul %1, %74, %cst_57 {dimension_numbers = #tpu.dot_dimension_numbers<[1], [0], [0], [1], [0, 0, 1, 1], [], []>} : vector<16x24xf32>, vector<24x8xf32>, vector<16x8xf32> -> vector<16x8xf32>
    %c2_58 = arith.constant 2 : index
    %c0_59 = arith.constant 0 : index
    %c0_60 = arith.constant 0 : index
    %76 = vector.load %arg4[%c2_58, %c0_59, %c0_60] : memref<4x1x8xf32, #tpu.memory_space<vmem>>, vector<1x1x8xf32>
    %77 = vector.shape_cast %76 : vector<1x1x8xf32> to vector<1x8xf32>
    %78 = vector.broadcast %77 : vector<1x8xf32> to vector<16x8xf32>
    %79 = arith.addf %75, %78 : vector<16x8xf32>
    %c2_61 = arith.constant 2 : index
    %c0_62 = arith.constant 0 : index
    %c0_63 = arith.constant 0 : index
    %80 = vector.load %arg5[%c2_61, %c0_62, %c0_63] : memref<4x16x8xf32, #tpu.memory_space<vmem>>, vector<1x16x8xf32>
    %81 = vector.shape_cast %80 : vector<1x16x8xf32> to vector<16x8xf32>
    %cst_64 = arith.constant dense<0.000000e+00> : vector<32x8xf32>
    %82 = tpu.matmul %3, %81, %cst_64 {dimension_numbers = #tpu.dot_dimension_numbers<[1], [0], [0], [1], [0, 0, 1, 1], [], []>} : vector<32x16xf32>, vector<16x8xf32>, vector<32x8xf32> -> vector<32x8xf32>
    %c2_65 = arith.constant 2 : index
    %c0_66 = arith.constant 0 : index
    %c0_67 = arith.constant 0 : index
    %83 = vector.load %arg6[%c2_65, %c0_66, %c0_67] : memref<4x1x8xf32, #tpu.memory_space<vmem>>, vector<1x1x8xf32>
    %84 = vector.shape_cast %83 : vector<1x1x8xf32> to vector<1x8xf32>
    %85 = vector.broadcast %84 : vector<1x8xf32> to vector<32x8xf32>
    %86 = arith.addf %82, %85 : vector<32x8xf32>
    %c2_68 = arith.constant 2 : index
    %c0_69 = arith.constant 0 : index
    %c0_70 = arith.constant 0 : index
    %87 = vector.load %arg7[%c2_68, %c0_69, %c0_70] : memref<4x16x8xf32, #tpu.memory_space<vmem>>, vector<1x16x8xf32>
    %88 = vector.shape_cast %87 : vector<1x16x8xf32> to vector<16x8xf32>
    %cst_71 = arith.constant dense<0.000000e+00> : vector<32x8xf32>
    %89 = tpu.matmul %3, %88, %cst_71 {dimension_numbers = #tpu.dot_dimension_numbers<[1], [0], [0], [1], [0, 0, 1, 1], [], []>} : vector<32x16xf32>, vector<16x8xf32>, vector<32x8xf32> -> vector<32x8xf32>
    %c2_72 = arith.constant 2 : index
    %c0_73 = arith.constant 0 : index
    %c0_74 = arith.constant 0 : index
    %90 = vector.load %arg8[%c2_72, %c0_73, %c0_74] : memref<4x1x8xf32, #tpu.memory_space<vmem>>, vector<1x1x8xf32>
    %91 = vector.shape_cast %90 : vector<1x1x8xf32> to vector<1x8xf32>
    %92 = vector.broadcast %91 : vector<1x8xf32> to vector<32x8xf32>
    %93 = arith.addf %89, %92 : vector<32x8xf32>
    %cst_75 = arith.constant dense<0.000000e+00> : vector<16x32xf32>
    %94 = tpu.matmul %79, %86, %cst_75 {dimension_numbers = #tpu.dot_dimension_numbers<[1], [1], [0], [0], [0, 0, 1, 0], [], []>} : vector<16x8xf32>, vector<32x8xf32>, vector<16x32xf32> -> vector<16x32xf32>
    %95 = arith.addf %94, %4 : vector<16x32xf32>
    %cst_76 = arith.constant dense<0xFF800000> : vector<16xf32>
    %96 = vector.multi_reduction <maximumf>, %95, %cst_76 [1] : vector<16x32xf32> to vector<16xf32>
    %97 = vector.shape_cast %96 : vector<16xf32> to vector<16x1xf32>
    %98 = vector.broadcast %97 : vector<16x1xf32> to vector<16x32xf32>
    %99 = arith.subf %95, %98 : vector<16x32xf32>
    %100 = math.exp %99 : vector<16x32xf32>
    %cst_77 = arith.constant dense<0.000000e+00> : vector<16xf32>
    %101 = vector.multi_reduction <add>, %100, %cst_77 [1] : vector<16x32xf32> to vector<16xf32>
    %102 = vector.shape_cast %101 : vector<16xf32> to vector<16x1xf32>
    %103 = tpu.reciprocal %102 : vector<16x1xf32> -> vector<16x1xf32>
    %104 = vector.broadcast %103 : vector<16x1xf32> to vector<16x32xf32>
    %105 = arith.mulf %100, %104 : vector<16x32xf32>
    %cst_78 = arith.constant dense<0.000000e+00> : vector<16x8xf32>
    %106 = tpu.matmul %105, %93, %cst_78 {dimension_numbers = #tpu.dot_dimension_numbers<[1], [0], [0], [1], [0, 0, 1, 1], [], []>} : vector<16x32xf32>, vector<32x8xf32>, vector<16x8xf32> -> vector<16x8xf32>
    %c3 = arith.constant 3 : index
    %c0_79 = arith.constant 0 : index
    %c0_80 = arith.constant 0 : index
    %107 = vector.load %arg3[%c3, %c0_79, %c0_80] : memref<4x24x8xf32, #tpu.memory_space<vmem>>, vector<1x24x8xf32>
    %108 = vector.shape_cast %107 : vector<1x24x8xf32> to vector<24x8xf32>
    %cst_81 = arith.constant dense<0.000000e+00> : vector<16x8xf32>
    %109 = tpu.matmul %1, %108, %cst_81 {dimension_numbers = #tpu.dot_dimension_numbers<[1], [0], [0], [1], [0, 0, 1, 1], [], []>} : vector<16x24xf32>, vector<24x8xf32>, vector<16x8xf32> -> vector<16x8xf32>
    %c3_82 = arith.constant 3 : index
    %c0_83 = arith.constant 0 : index
    %c0_84 = arith.constant 0 : index
    %110 = vector.load %arg4[%c3_82, %c0_83, %c0_84] : memref<4x1x8xf32, #tpu.memory_space<vmem>>, vector<1x1x8xf32>
    %111 = vector.shape_cast %110 : vector<1x1x8xf32> to vector<1x8xf32>
    %112 = vector.broadcast %111 : vector<1x8xf32> to vector<16x8xf32>
    %113 = arith.addf %109, %112 : vector<16x8xf32>
    %c3_85 = arith.constant 3 : index
    %c0_86 = arith.constant 0 : index
    %c0_87 = arith.constant 0 : index
    %114 = vector.load %arg5[%c3_85, %c0_86, %c0_87] : memref<4x16x8xf32, #tpu.memory_space<vmem>>, vector<1x16x8xf32>
    %115 = vector.shape_cast %114 : vector<1x16x8xf32> to vector<16x8xf32>
    %cst_88 = arith.constant dense<0.000000e+00> : vector<32x8xf32>
    %116 = tpu.matmul %3, %115, %cst_88 {dimension_numbers = #tpu.dot_dimension_numbers<[1], [0], [0], [1], [0, 0, 1, 1], [], []>} : vector<32x16xf32>, vector<16x8xf32>, vector<32x8xf32> -> vector<32x8xf32>
    %c3_89 = arith.constant 3 : index
    %c0_90 = arith.constant 0 : index
    %c0_91 = arith.constant 0 : index
    %117 = vector.load %arg6[%c3_89, %c0_90, %c0_91] : memref<4x1x8xf32, #tpu.memory_space<vmem>>, vector<1x1x8xf32>
    %118 = vector.shape_cast %117 : vector<1x1x8xf32> to vector<1x8xf32>
    %119 = vector.broadcast %118 : vector<1x8xf32> to vector<32x8xf32>
    %120 = arith.addf %116, %119 : vector<32x8xf32>
    %c3_92 = arith.constant 3 : index
    %c0_93 = arith.constant 0 : index
    %c0_94 = arith.constant 0 : index
    %121 = vector.load %arg7[%c3_92, %c0_93, %c0_94] : memref<4x16x8xf32, #tpu.memory_space<vmem>>, vector<1x16x8xf32>
    %122 = vector.shape_cast %121 : vector<1x16x8xf32> to vector<16x8xf32>
    %cst_95 = arith.constant dense<0.000000e+00> : vector<32x8xf32>
    %123 = tpu.matmul %3, %122, %cst_95 {dimension_numbers = #tpu.dot_dimension_numbers<[1], [0], [0], [1], [0, 0, 1, 1], [], []>} : vector<32x16xf32>, vector<16x8xf32>, vector<32x8xf32> -> vector<32x8xf32>
    %c3_96 = arith.constant 3 : index
    %c0_97 = arith.constant 0 : index
    %c0_98 = arith.constant 0 : index
    %124 = vector.load %arg8[%c3_96, %c0_97, %c0_98] : memref<4x1x8xf32, #tpu.memory_space<vmem>>, vector<1x1x8xf32>
    %125 = vector.shape_cast %124 : vector<1x1x8xf32> to vector<1x8xf32>
    %126 = vector.broadcast %125 : vector<1x8xf32> to vector<32x8xf32>
    %127 = arith.addf %123, %126 : vector<32x8xf32>
    %cst_99 = arith.constant dense<0.000000e+00> : vector<16x32xf32>
    %128 = tpu.matmul %113, %120, %cst_99 {dimension_numbers = #tpu.dot_dimension_numbers<[1], [1], [0], [0], [0, 0, 1, 0], [], []>} : vector<16x8xf32>, vector<32x8xf32>, vector<16x32xf32> -> vector<16x32xf32>
    %129 = arith.addf %128, %4 : vector<16x32xf32>
    %cst_100 = arith.constant dense<0xFF800000> : vector<16xf32>
    %130 = vector.multi_reduction <maximumf>, %129, %cst_100 [1] : vector<16x32xf32> to vector<16xf32>
    %131 = vector.shape_cast %130 : vector<16xf32> to vector<16x1xf32>
    %132 = vector.broadcast %131 : vector<16x1xf32> to vector<16x32xf32>
    %133 = arith.subf %129, %132 : vector<16x32xf32>
    %134 = math.exp %133 : vector<16x32xf32>
    %cst_101 = arith.constant dense<0.000000e+00> : vector<16xf32>
    %135 = vector.multi_reduction <add>, %134, %cst_101 [1] : vector<16x32xf32> to vector<16xf32>
    %136 = vector.shape_cast %135 : vector<16xf32> to vector<16x1xf32>
    %137 = tpu.reciprocal %136 : vector<16x1xf32> -> vector<16x1xf32>
    %138 = vector.broadcast %137 : vector<16x1xf32> to vector<16x32xf32>
    %139 = arith.mulf %134, %138 : vector<16x32xf32>
    %cst_102 = arith.constant dense<0.000000e+00> : vector<16x8xf32>
    %140 = tpu.matmul %139, %127, %cst_102 {dimension_numbers = #tpu.dot_dimension_numbers<[1], [0], [0], [1], [0, 0, 1, 1], [], []>} : vector<16x32xf32>, vector<32x8xf32>, vector<16x8xf32> -> vector<16x8xf32>
    %141 = tpu.concatenate %38, %72, %106, %140 in 1 : vector<16x8xf32>, vector<16x8xf32>, vector<16x8xf32>, vector<16x8xf32> -> vector<16x32xf32>
    %c0_103 = arith.constant 0 : index
    %c0_104 = arith.constant 0 : index
    %142 = vector.load %arg9[%c0_103, %c0_104] : memref<32x32xf32, #tpu.memory_space<vmem>>, vector<32x32xf32>
    %cst_105 = arith.constant dense<0.000000e+00> : vector<16x32xf32>
    %143 = tpu.matmul %141, %142, %cst_105 {dimension_numbers = #tpu.dot_dimension_numbers<[1], [0], [0], [1], [0, 0, 1, 1], [], []>} : vector<16x32xf32>, vector<32x32xf32>, vector<16x32xf32> -> vector<16x32xf32>
    %c0_106 = arith.constant 0 : index
    %c0_107 = arith.constant 0 : index
    %144 = vector.load %arg10[%c0_106, %c0_107] : memref<1x32xf32, #tpu.memory_space<vmem>>, vector<1x32xf32>
    %145 = vector.broadcast %144 : vector<1x32xf32> to vector<16x32xf32>
    %146 = arith.addf %143, %145 : vector<16x32xf32>
    %147 = vector.shape_cast %146 : vector<16x32xf32> to vector<2x8x32xf32>
    %c0_108 = arith.constant 0 : index
    %c0_109 = arith.constant 0 : index
    %c0_110 = arith.constant 0 : index
    %148 = vector.load %arg11[%c0_108, %c0_109, %c0_110] : memref<2x8x32xf32, #tpu.memory_space<vmem>>, vector<2x8x32xf32>
    tpu.vector_store %arg11[%c0_108, %c0_109, %c0_110], %147 {strides = array<i32>} : memref<2x8x32xf32, #tpu.memory_space<vmem>>, vector<2x8x32xf32>,
    return
  }
}

</mosaic_0001>

<llo_original>
// kernel: tpu_custom_call.1
$region0: #{tpu_custom_call.1}
  #allocation0 [shape = 'u32[]', space=smem, size = 0x4, offset = 0x4, fixed_abs, tag = 'smem constant byte address 0x4 - core index']
  #allocation1 [shape = 'u32[144,128]{1,0:T(1,128)}', space=vmem, size = 0x12000, scoped, tag = 'internal scratch']
  %s0 = inlined_call_operand.vmem [shape: f32[2,8,24], index: 0, kind: input, shape index: {}]
  %s1 = inlined_call_operand.vmem [shape: f32[2,16,16], index: 1, kind: input, shape index: {}]
  %s2 = inlined_call_operand.vmem [shape: f32[16,32], index: 2, kind: input, shape index: {}]
  %s3 = inlined_call_operand.vmem [shape: f32[4,24,8], index: 3, kind: input, shape index: {}]
  %s4 = inlined_call_operand.vmem [shape: f32[4,1,8], index: 4, kind: input, shape index: {}]
  %s5 = inlined_call_operand.vmem [shape: f32[4,16,8], index: 5, kind: input, shape index: {}]
  %s6 = inlined_call_operand.vmem [shape: f32[4,1,8], index: 6, kind: input, shape index: {}]
  %s7 = inlined_call_operand.vmem [shape: f32[4,16,8], index: 7, kind: input, shape index: {}]
  %s8 = inlined_call_operand.vmem [shape: f32[4,1,8], index: 8, kind: input, shape index: {}]
  %s9 = inlined_call_operand.vmem [shape: f32[32,32], index: 9, kind: input, shape index: {}]
  %s10 = inlined_call_operand.vmem [shape: f32[1,32], index: 10, kind: input, shape index: {}]
  %s11 = inlined_call_operand.hbm [shape: f32[2,8,32], index: 11, kind: output, shape index: {}]
  %s12 = sld [smem:[#allocation0]]
  $region54: #{tpu_custom_call.1} parent=0
    _
  %s14 = ssub.s32 1, %s12
  %s15 = scalar_select 0, %s14, %s12
  $region1: #{tpu_custom_call.1} parent=0
    #allocation2 [shape = 'u8[8192]{0}', space=vmem, size = 0x2000, scoped, tag = 'output window, operand 0, single buffered']
    #allocation3 [shape = 's32[1]{0}', space=sflag, size = 0x4, scoped, tag = 'scoped memory for tpu_custom_call.1']
    %16 = vsyncpa [#allocation3], 0
    // Predicated region
    $region2: #{tpu_custom_call.1} parent=1 // pred_check
      _
    $region3: #{tpu_custom_call.1} parent=1 // pred_check_branch
      %18 = sbr.rel (0) target = $region5
    $region4: #{tpu_custom_call.1} parent=1 // pred_region
      _
    $region5: #{tpu_custom_call.1} parent=1 // pred_fallthru
      _
    // Predicated region
    $region6: #{tpu_custom_call.1} parent=1 // pred_check
      _
    $region7: #{tpu_custom_call.1} parent=1 // pred_check_branch
      %20 = sbr.rel (0) target = $region9
    $region8: #{tpu_custom_call.1} parent=1 // pred_region
      _
    $region9: #{tpu_custom_call.1} parent=1 // pred_fallthru
      _
    // Predicated region
    $region10: #{tpu_custom_call.1} parent=1 // pred_check
      _
    $region11: #{tpu_custom_call.1} parent=1 // pred_check_branch
      %22 = sbr.rel (0) target = $region13
    $region12: #{tpu_custom_call.1} parent=1 // pred_region
      _
    $region13: #{tpu_custom_call.1} parent=1 // pred_fallthru
      _
    // Predicated region
    $region14: #{tpu_custom_call.1} parent=1 // pred_check
      _
    $region15: #{tpu_custom_call.1} parent=1 // pred_check_branch
      %24 = sbr.rel (0) target = $region17
    $region16: #{tpu_custom_call.1} parent=1 // pred_region
      _
    $region17: #{tpu_custom_call.1} parent=1 // pred_fallthru
      _
    // Predicated region
    $region18: #{tpu_custom_call.1} parent=1 // pred_check
      _
    $region19: #{tpu_custom_call.1} parent=1 // pred_check_branch
      %26 = sbr.rel (0) target = $region21
    $region20: #{tpu_custom_call.1} parent=1 // pred_region
      _
    $region21: #{tpu_custom_call.1} parent=1 // pred_fallthru
      _
    // Predicated region
    $region22: #{tpu_custom_call.1} parent=1 // pred_check
      _
    $region23: #{tpu_custom_call.1} parent=1 // pred_check_branch
      %28 = sbr.rel (0) target = $region25
    $region24: #{tpu_custom_call.1} parent=1 // pred_region
      _
    $region25: #{tpu_custom_call.1} parent=1 // pred_fallthru
      _
    // Predicated region
    $region26: #{tpu_custom_call.1} parent=1 // pred_check
      _
    $region27: #{tpu_custom_call.1} parent=1 // pred_check_branch
      %30 = sbr.rel (0) target = $region29
    $region28: #{tpu_custom_call.1} parent=1 // pred_region
      _
    $region29: #{tpu_custom_call.1} parent=1 // pred_fallthru
      _
    // Predicated region
    $region30: #{tpu_custom_call.1} parent=1 // pred_check
      _
    $region31: #{tpu_custom_call.1} parent=1 // pred_check_branch
      %32 = sbr.rel (0) target = $region33
    $region32: #{tpu_custom_call.1} parent=1 // pred_region
      _
    $region33: #{tpu_custom_call.1} parent=1 // pred_fallthru
      _
    // Predicated region
    $region34: #{tpu_custom_call.1} parent=1 // pred_check
      _
    $region35: #{tpu_custom_call.1} parent=1 // pred_check_branch
      %34 = sbr.rel (0) target = $region37
    $region36: #{tpu_custom_call.1} parent=1 // pred_region
      _
    $region37: #{tpu_custom_call.1} parent=1 // pred_fallthru
      _
    // Predicated region
    $region38: #{tpu_custom_call.1} parent=1 // pred_check
      _
    $region39: #{tpu_custom_call.1} parent=1 // pred_check_branch
      %36 = sbr.rel (0) target = $region41
    $region40: #{tpu_custom_call.1} parent=1 // pred_region
      _
    $region41: #{tpu_custom_call.1} parent=1 // pred_fallthru
      _
    // Predicated region
    $region42: #{tpu_custom_call.1} parent=1 // pred_check
      _
    $region43: #{tpu_custom_call.1} parent=1 // pred_check_branch
      %38 = sbr.rel (0) target = $region45
    $region44: #{tpu_custom_call.1} parent=1 // pred_region
      _
    $region45: #{tpu_custom_call.1} parent=1 // pred_fallthru
      _
    %v39 = vld [vmem:[%s0] sm:$0xff]
    %v40 = vld [vmem:[%s0 + $0x8] sm:$0xff]
    %v41 = vld [vmem:[%s1] sm:$0xff]
    %v42 = vld [vmem:[%s1 + $0x8] sm:$0xff]
    %v43 = vld [vmem:[%s1 + $0x10] sm:$0xff]
    %v44 = vld [vmem:[%s1 + $0x18] sm:$0xff]
    %v45 = vld [vmem:[%s2] sm:$0xff]
    %v46 = vld [vmem:[%s2 + $0x8] sm:$0xff]
    %v47 = vld [vmem:[%s3] sm:$0xff]
    %v48 = vld [vmem:[%s3 + $0x8] sm:$0xff]
    %v49 = vld [vmem:[%s3 + $0x10] sm:$0xff]
    %v50 = vld [vmem:[%s4] sm:$0x1]
    %v52 = vlaneseq
    %v53 = vshrl.u32 %v52, 7
    %v54 = vsub.s32 0, %v53
    %v55 = vrot.slane %v50, %v54
    %vm57 = vcmask 195584
    %v59 = vsel %vm57, %v39, 0
    %v62 = vsel %vm57, %v40, 0
    %64 = vmatprep.subr.mxu0 0.0
    %65 = vmatpush1.msra.mxu0 0.0
    %66 = vmatprep.subr.mxu0 0.0
    %67 = vmatpush1.msra.mxu0 0.0
    %68 = vmatprep.subr.mxu0 0.0
    %69 = vmatpush1.msra.mxu0 0.0
    %70 = vmatprep.subr.mxu0 0.0
    %71 = vmatpush1.msra.mxu0 0.0
    %72 = vmatprep.subr.mxu0 0.0
    %73 = vmatpush1.msra.mxu0 0.0
    %74 = vmatprep.subr.mxu0 0.0
    %75 = vmatpush1.msra.mxu0 0.0
    %76 = vmatprep.subr.mxu0 0.0
    %77 = vmatpush1.msra.mxu0 0.0
    %78 = vmatprep.subr.mxu0 0.0
    %79 = vmatpush1.msra.mxu0 0.0
    %80 = vmatprep.subr.mxu0 0.0
    %81 = vmatpush1.msra.mxu0 0.0
    %82 = vmatprep.subr.mxu0 0.0
    %83 = vmatpush1.msra.mxu0 0.0
    %84 = vmatprep.subr.mxu0 0.0
    %85 = vmatpush1.msra.mxu0 0.0
    %86 = vmatprep.subr.mxu0 0.0
    %87 = vmatpush1.msra.mxu0 0.0
    %88 = vmatprep.subr.mxu0 0.0
    %89 = vmatpush1.msra.mxu0 0.0
    %90 = vmatprep.subr.mxu0 0.0
    %91 = vmatpush1.msra.mxu0 %v49
    %92 = vmatprep.subr.mxu0 0.0
    %93 = vmatpush1.msra.mxu0 %v48
    %94 = vmatprep.subr.mxu0 0.0
    %95 = vmatpush1.msra.mxu0 %v47
    %96 = vmatprep.subr.mxu0 0.0
    %97 = vmatpush2.msra.mxu0 0.0
    %98 = vmatprep.subr.mxu0 0.0
    %99 = vmatpush2.msra.mxu0 0.0
    %100 = vmatprep.subr.mxu0 0.0
    %101 = vmatpush2.msra.mxu0 0.0
    %102 = vmatprep.subr.mxu0 0.0
    %103 = vmatpush2.msra.mxu0 0.0
    %104 = vmatprep.subr.mxu0 0.0
    %105 = vmatpush2.msra.mxu0 0.0
    %106 = vmatprep.subr.mxu0 0.0
    %107 = vmatpush2.msra.mxu0 0.0
    %108 = vmatprep.subr.mxu0 0.0
    %109 = vmatpush2.msra.mxu0 0.0
    %110 = vmatprep.subr.mxu0 0.0
    %111 = vmatpush2.msra.mxu0 0.0
    %112 = vmatprep.subr.mxu0 0.0
    %113 = vmatpush2.msra.mxu0 0.0
    %114 = vmatprep.subr.mxu0 0.0
    %115 = vmatpush2.msra.mxu0 0.0
    %116 = vmatprep.subr.mxu0 0.0
    %117 = vmatpush2.msra.mxu0 0.0
    %118 = vmatprep.subr.mxu0 0.0
    %119 = vmatpush2.msra.mxu0 0.0
    %120 = vmatprep.subr.mxu0 0.0
    %121 = vmatpush2.msra.mxu0 0.0
    %122 = vmatprep.subr.mxu0 0.0
    %123 = vmatpush2.msra.mxu0 0.0
    %124 = vmatprep.subr.mxu0 0.0
    %125 = vmatpush2.msra.mxu0 0.0
    %126 = vmatprep.subr.mxu0 0.0
    %127 = vmatpush2.msra.mxu0 0.0
    %128 = vmatprep.mubr.f32.mxu0 0.0
    %129 = vmatmul.mubr.f32.gmra.mxu0 %v59
    %v130 = vpop.f32.mrf.mxu0
    %v131 = vadd.f32 %v55, %v130
    %v132 = vpop.f32.mrf.mxu0
    %133 = vmatprep.mubr.f32.mxu0 0.0
    %134 = vmatmul.mubr.f32.gmra.mxu0 %v62
    %v135 = vpop.f32.mrf.mxu0
    %v136 = vadd.f32 %v55, %v135
    %v137 = vpop.f32.mrf.mxu0
    %138 = vdwg.mxu0
    %v139 = vld [vmem:[%s5] sm:$0xff]
    %v140 = vld [vmem:[%s5 + $0x8] sm:$0xff]
    %v141 = vld [vmem:[%s6] sm:$0x1]
    %v143 = vlaneseq
    %v144 = vshrl.u32 %v143, 7
    %v145 = vsub.s32 0, %v144
    %v146 = vrot.slane %v141, %v145
    %vm148 = vcmask 130048
    %v150 = vsel %vm148, %v41, 0
    %v153 = vsel %vm148, %v42, 0
    %v156 = vsel %vm148, %v43, 0
    %v159 = vsel %vm148, %v44, 0
    %161 = vmatprep.subr.mxu0 0.0
    %162 = vmatpush1.msra.mxu0 0.0
    %163 = vmatprep.subr.mxu0 0.0
    %164 = vmatpush1.msra.mxu0 0.0
    %165 = vmatprep.subr.mxu0 0.0
    %166 = vmatpush1.msra.mxu0 0.0
    %167 = vmatprep.subr.mxu0 0.0
    %168 = vmatpush1.msra.mxu0 0.0
    %169 = vmatprep.subr.mxu0 0.0
    %170 = vmatpush1.msra.mxu0 0.0
    %171 = vmatprep.subr.mxu0 0.0
    %172 = vmatpush1.msra.mxu0 0.0
    %173 = vmatprep.subr.mxu0 0.0
    %174 = vmatpush1.msra.mxu0 0.0
    %175 = vmatprep.subr.mxu0 0.0
    %176 = vmatpush1.msra.mxu0 0.0
    %177 = vmatprep.subr.mxu0 0.0
    %178 = vmatpush1.msra.mxu0 0.0
    %179 = vmatprep.subr.mxu0 0.0
    %180 = vmatpush1.msra.mxu0 0.0
    %181 = vmatprep.subr.mxu0 0.0
    %182 = vmatpush1.msra.mxu0 0.0
    %183 = vmatprep.subr.mxu0 0.0
    %184 = vmatpush1.msra.mxu0 0.0
    %185 = vmatprep.subr.mxu0 0.0
    %186 = vmatpush1.msra.mxu0 0.0
    %187 = vmatprep.subr.mxu0 0.0
    %188 = vmatpush1.msra.mxu0 0.0
    %189 = vmatprep.subr.mxu0 0.0
    %190 = vmatpush1.msra.mxu0 %v140
    %191 = vmatprep.subr.mxu0 0.0
    %192 = vmatpush1.msra.mxu0 %v139
    %193 = vmatprep.subr.mxu0 0.0
    %194 = vmatpush2.msra.mxu0 0.0
    %195 = vmatprep.subr.mxu0 0.0
    %196 = vmatpush2.msra.mxu0 0.0
    %197 = vmatprep.subr.mxu0 0.0
    %198 = vmatpush2.msra.mxu0 0.0
    %199 = vmatprep.subr.mxu0 0.0
    %200 = vmatpush2.msra.mxu0 0.0
    %201 = vmatprep.subr.mxu0 0.0
    %202 = vmatpush2.msra.mxu0 0.0
    %203 = vmatprep.subr.mxu0 0.0
    %204 = vmatpush2.msra.mxu0 0.0
    %205 = vmatprep.subr.mxu0 0.0
    %206 = vmatpush2.msra.mxu0 0.0
    %207 = vmatprep.subr.mxu0 0.0
    %208 = vmatpush2.msra.mxu0 0.0
    %209 = vmatprep.subr.mxu0 0.0
    %210 = vmatpush2.msra.mxu0 0.0
    %211 = vmatprep.subr.mxu0 0.0
    %212 = vmatpush2.msra.mxu0 0.0
    %213 = vmatprep.subr.mxu0 0.0
    %214 = vmatpush2.msra.mxu0 0.0
    %215 = vmatprep.subr.mxu0 0.0
    %216 = vmatpush2.msra.mxu0 0.0
    %217 = vmatprep.subr.mxu0 0.0
    %218 = vmatpush2.msra.mxu0 0.0
    %219 = vmatprep.subr.mxu0 0.0
    %220 = vmatpush2.msra.mxu0 0.0
    %221 = vmatprep.subr.mxu0 0.0
    %222 = vmatpush2.msra.mxu0 0.0
    %223 = vmatprep.subr.mxu0 0.0
    %224 = vmatpush2.msra.mxu0 0.0
    %225 = vmatprep.mubr.f32.mxu0 0.0
    %226 = vmatmul.mubr.f32.gmra.mxu0 %v150
    %v227 = vpop.f32.mrf.mxu0
    %v228 = vadd.f32 %v146, %v227
    %v229 = vpop.f32.mrf.mxu0
    %230 = vmatprep.mubr.f32.mxu0 0.0
    %231 = vmatmul.mubr.f32.gmra.mxu0 %v153
    %v232 = vpop.f32.mrf.mxu0
    %v233 = vadd.f32 %v146, %v232
    %v234 = vpop.f32.mrf.mxu0
    %235 = vmatprep.mubr.f32.mxu0 0.0
    %236 = vmatmul.mubr.f32.gmra.mxu0 %v156
    %v237 = vpop.f32.mrf.mxu0
    %v238 = vadd.f32 %v146, %v237
    %v239 = vpop.f32.mrf.mxu0
    %240 = vmatprep.mubr.f32.mxu0 0.0
    %241 = vmatmul.mubr.f32.gmra.mxu0 %v159
    %v242 = vpop.f32.mrf.mxu0
    %v243 = vadd.f32 %v146, %v242
    %v244 = vpop.f32.mrf.mxu0
    %245 = vdwg.mxu0
    %v246 = vld [vmem:[%s7] sm:$0xff]
    %v247 = vld [vmem:[%s7 + $0x8] sm:$0xff]
    %v248 = vld [vmem:[%s8] sm:$0x1]
    %v250 = vlaneseq
    %v251 = vshrl.u32 %v250, 7
    %v252 = vsub.s32 0, %v251
    %v253 = vrot.slane %v248, %v252
    %255 = vmatprep.subr.mxu0 0.0
    %256 = vmatpush1.msra.mxu0 0.0
    %257 = vmatprep.subr.mxu0 0.0
    %258 = vmatpush1.msra.mxu0 0.0
    %259 = vmatprep.subr.mxu0 0.0
    %260 = vmatpush1.msra.mxu0 0.0
    %261 = vmatprep.subr.mxu0 0.0
    %262 = vmatpush1.msra.mxu0 0.0
    %263 = vmatprep.subr.mxu0 0.0
    %264 = vmatpush1.msra.mxu0 0.0
    %265 = vmatprep.subr.mxu0 0.0
    %266 = vmatpush1.msra.mxu0 0.0
    %267 = vmatprep.subr.mxu0 0.0
    %268 = vmatpush1.msra.mxu0 0.0
    %269 = vmatprep.subr.mxu0 0.0
    %270 = vmatpush1.msra.mxu0 0.0
    %271 = vmatprep.subr.mxu0 0.0
    %272 = vmatpush1.msra.mxu0 0.0
    %273 = vmatprep.subr.mxu0 0.0
    %274 = vmatpush1.msra.mxu0 0.0
    %275 = vmatprep.subr.mxu0 0.0
    %276 = vmatpush1.msra.mxu0 0.0
    %277 = vmatprep.subr.mxu0 0.0
    %278 = vmatpush1.msra.mxu0 0.0
    %279 = vmatprep.subr.mxu0 0.0
    %280 = vmatpush1.msra.mxu0 0.0
    %281 = vmatprep.subr.mxu0 0.0
    %282 = vmatpush1.msra.mxu0 0.0
    %283 = vmatprep.subr.mxu0 0.0
    %284 = vmatpush1.msra.mxu0 %v247
    %285 = vmatprep.subr.mxu0 0.0
    %286 = vmatpush1.msra.mxu0 %v246
    %287 = vmatprep.subr.mxu0 0.0
    %288 = vmatpush2.msra.mxu0 0.0
    %289 = vmatprep.subr.mxu0 0.0
    %290 = vmatpush2.msra.mxu0 0.0
    %291 = vmatprep.subr.mxu0 0.0
    %292 = vmatpush2.msra.mxu0 0.0
    %293 = vmatprep.subr.mxu0 0.0
    %294 = vmatpush2.msra.mxu0 0.0
    %295 = vmatprep.subr.mxu0 0.0
    %296 = vmatpush2.msra.mxu0 0.0
    %297 = vmatprep.subr.mxu0 0.0
    %298 = vmatpush2.msra.mxu0 0.0
    %299 = vmatprep.subr.mxu0 0.0
    %300 = vmatpush2.msra.mxu0 0.0
    %301 = vmatprep.subr.mxu0 0.0
    %302 = vmatpush2.msra.mxu0 0.0
    %303 = vmatprep.subr.mxu0 0.0
    %304 = vmatpush2.msra.mxu0 0.0
    %305 = vmatprep.subr.mxu0 0.0
    %306 = vmatpush2.msra.mxu0 0.0
    %307 = vmatprep.subr.mxu0 0.0
    %308 = vmatpush2.msra.mxu0 0.0
    %309 = vmatprep.subr.mxu0 0.0
    %310 = vmatpush2.msra.mxu0 0.0
    %311 = vmatprep.subr.mxu0 0.0
    %312 = vmatpush2.msra.mxu0 0.0
    %313 = vmatprep.subr.mxu0 0.0
    %314 = vmatpush2.msra.mxu0 0.0
    %315 = vmatprep.subr.mxu0 0.0
    %316 = vmatpush2.msra.mxu0 0.0
    %317 = vmatprep.subr.mxu0 0.0
    %318 = vmatpush2.msra.mxu0 0.0
    %319 = vmatprep.mubr.f32.mxu0 0.0
    %320 = vmatmul.mubr.f32.gmra.mxu0 %v150
    %v321 = vpop.f32.mrf.mxu0
    %v322 = vadd.f32 %v253, %v321
    %v323 = vpop.f32.mrf.mxu0
    %324 = vmatprep.mubr.f32.mxu0 0.0
    %325 = vmatmul.mubr.f32.gmra.mxu0 %v153
    %v326 = vpop.f32.mrf.mxu0
    %v327 = vadd.f32 %v253, %v326
    %v328 = vpop.f32.mrf.mxu0
    %329 = vmatprep.mubr.f32.mxu0 0.0
    %330 = vmatmul.mubr.f32.gmra.mxu0 %v156
    %v331 = vpop.f32.mrf.mxu0
    %v332 = vadd.f32 %v253, %v331
    %v333 = vpop.f32.mrf.mxu0
    %334 = vmatprep.mubr.f32.mxu0 0.0
    %335 = vmatmul.mubr.f32.gmra.mxu0 %v159
    %v336 = vpop.f32.mrf.mxu0
    %v337 = vadd.f32 %v253, %v336
    %v338 = vpop.f32.mrf.mxu0
    %339 = vdwg.mxu0
    %vm340 = vcmask 64512
    %v342 = vsel %vm340, %v131, 0
    %v345 = vsel %vm340, %v136, 0
    %v348 = vsel %vm340, %v228, 0
    %v351 = vsel %vm340, %v233, 0
    %v354 = vsel %vm340, %v238, 0
    %v357 = vsel %vm340, %v243, 0
    %359 = vmatprep.subr.mxu0 0.0
    %360 = vmatpush1.xpose.msra.mxu0 0.0
    %361 = vmatprep.subr.mxu0 0.0
    %362 = vmatpush1.xpose.msra.mxu0 0.0
    %363 = vmatprep.subr.mxu0 0.0
    %364 = vmatpush1.xpose.msra.mxu0 0.0
    %365 = vmatprep.subr.mxu0 0.0
    %366 = vmatpush1.xpose.msra.mxu0 0.0
    %367 = vmatprep.subr.mxu0 0.0
    %368 = vmatpush1.xpose.msra.mxu0 0.0
    %369 = vmatprep.subr.mxu0 0.0
    %370 = vmatpush1.xpose.msra.mxu0 0.0
    %371 = vmatprep.subr.mxu0 0.0
    %372 = vmatpush1.xpose.msra.mxu0 0.0
    %373 = vmatprep.subr.mxu0 0.0
    %374 = vmatpush1.xpose.msra.mxu0 0.0
    %375 = vmatprep.subr.mxu0 0.0
    %376 = vmatpush1.xpose.msra.mxu0 0.0
    %377 = vmatprep.subr.mxu0 0.0
    %378 = vmatpush1.xpose.msra.mxu0 0.0
    %379 = vmatprep.subr.mxu0 0.0
    %380 = vmatpush1.xpose.msra.mxu0 0.0
    %381 = vmatprep.subr.mxu0 0.0
    %382 = vmatpush1.xpose.msra.mxu0 0.0
    %383 = vmatprep.subr.mxu0 0.0
    %384 = vmatpush1.xpose.msra.mxu0 %v357
    %385 = vmatprep.subr.mxu0 0.0
    %386 = vmatpush1.xpose.msra.mxu0 %v354
    %387 = vmatprep.subr.mxu0 0.0
    %388 = vmatpush1.xpose.msra.mxu0 %v351
    %389 = vmatprep.subr.mxu0 0.0
    %390 = vmatpush1.xpose.msra.mxu0 %v348
    %391 = vmatprep.subr.mxu0 0.0
    %392 = vmatpush2.xpose.msra.mxu0 0.0
    %393 = vmatprep.subr.mxu0 0.0
    %394 = vmatpush2.xpose.msra.mxu0 0.0
    %395 = vmatprep.subr.mxu0 0.0
    %396 = vmatpush2.xpose.msra.mxu0 0.0
    %397 = vmatprep.subr.mxu0 0.0
    %398 = vmatpush2.xpose.msra.mxu0 0.0
    %399 = vmatprep.subr.mxu0 0.0
    %400 = vmatpush2.xpose.msra.mxu0 0.0
    %401 = vmatprep.subr.mxu0 0.0
    %402 = vmatpush2.xpose.msra.mxu0 0.0
    %403 = vmatprep.subr.mxu0 0.0
    %404 = vmatpush2.xpose.msra.mxu0 0.0
    %405 = vmatprep.subr.mxu0 0.0
    %406 = vmatpush2.xpose.msra.mxu0 0.0
    %407 = vmatprep.subr.mxu0 0.0
    %408 = vmatpush2.xpose.msra.mxu0 0.0
    %409 = vmatprep.subr.mxu0 0.0
    %410 = vmatpush2.xpose.msra.mxu0 0.0
    %411 = vmatprep.subr.mxu0 0.0
    %412 = vmatpush2.xpose.msra.mxu0 0.0
    %413 = vmatprep.subr.mxu0 0.0
    %414 = vmatpush2.xpose.msra.mxu0 0.0
    %415 = vmatprep.subr.mxu0 0.0
    %416 = vmatpush2.xpose.msra.mxu0 0.0
    %417 = vmatprep.subr.mxu0 0.0
    %418 = vmatpush2.xpose.msra.mxu0 0.0
    %419 = vmatprep.subr.mxu0 0.0
    %420 = vmatpush2.xpose.msra.mxu0 0.0
    %421 = vmatprep.subr.mxu0 0.0
    %422 = vmatpush2.xpose.msra.mxu0 0.0
    %423 = vmatprep.mubr.f32.mxu0 0.0
    %424 = vmatmul.mubr.f32.gmra.mxu0 %v342
    %v425 = vpop.f32.mrf.mxu0
    %v426 = vadd.f32 %v45, %v425
    %v427 = vpop.f32.mrf.mxu0
    %428 = vmatprep.mubr.f32.mxu0 0.0
    %429 = vmatmul.mubr.f32.gmra.mxu0 %v345
    %v430 = vpop.f32.mrf.mxu0
    %v431 = vadd.f32 %v46, %v430
    %v432 = vpop.f32.mrf.mxu0
    %433 = vdwg.mxu0
    %vm434 = vcmask 261120
    %v435 = vsel %vm434, %v426, -inf
    %436 = vmax.xlane.f32.xlu0 %v435
    %v437 = vpop.xlane.xlu0 %436
    %v438 = vsel %vm434, %v431, -inf
    %439 = vmax.xlane.f32.xlu0 %v438
    %v440 = vpop.xlane.xlu0 %439
    %v441 = vsub.f32 %v426, %v437
    %v442 = vsub.f32 %v431, %v440
    %v443 = vmul.f32 %v441, 1.442695
    %v444 = vpow.pop %v443
    %v445 = vmul.f32 %v442, 1.442695
    %v446 = vpow.pop %v445
    %v447 = vsel %vm434, %v444, 0.0
    %448 = vadd.xlane.f32.xlu0 %v447
    %v449 = vpop.xlane.xlu0 %448
    %v450 = vsel %vm434, %v446, 0.0
    %451 = vadd.xlane.f32.xlu0 %v450
    %v452 = vpop.xlane.xlu0 %451
    %v453 = vrcp.pop %v449
    %v454 = vrcp.pop %v452
    %v455 = vmul.f32 %v444, %v453
    %v456 = vmul.f32 %v446, %v454
    %v458 = vsel %vm434, %v455, 0
    %v461 = vsel %vm434, %v456, 0
    %463 = vmatprep.subr.mxu0 0.0
    %464 = vmatpush1.msra.mxu0 0.0
    %465 = vmatprep.subr.mxu0 0.0
    %466 = vmatpush1.msra.mxu0 0.0
    %467 = vmatprep.subr.mxu0 0.0
    %468 = vmatpush1.msra.mxu0 0.0
    %469 = vmatprep.subr.mxu0 0.0
    %470 = vmatpush1.msra.mxu0 0.0
    %471 = vmatprep.subr.mxu0 0.0
    %472 = vmatpush1.msra.mxu0 0.0
    %473 = vmatprep.subr.mxu0 0.0
    %474 = vmatpush1.msra.mxu0 0.0
    %475 = vmatprep.subr.mxu0 0.0
    %476 = vmatpush1.msra.mxu0 0.0
    %477 = vmatprep.subr.mxu0 0.0
    %478 = vmatpush1.msra.mxu0 0.0
    %479 = vmatprep.subr.mxu0 0.0
    %480 = vmatpush1.msra.mxu0 0.0
    %481 = vmatprep.subr.mxu0 0.0
    %482 = vmatpush1.msra.mxu0 0.0
    %483 = vmatprep.subr.mxu0 0.0
    %484 = vmatpush1.msra.mxu0 0.0
    %485 = vmatprep.subr.mxu0 0.0
    %486 = vmatpush1.msra.mxu0 0.0
    %487 = vmatprep.subr.mxu0 0.0
    %488 = vmatpush1.msra.mxu0 %v337
    %489 = vmatprep.subr.mxu0 0.0
    %490 = vmatpush1.msra.mxu0 %v332
    %491 = vmatprep.subr.mxu0 0.0
    %492 = vmatpush1.msra.mxu0 %v327
    %493 = vmatprep.subr.mxu0 0.0
    %494 = vmatpush1.msra.mxu0 %v322
    %495 = vmatprep.subr.mxu0 0.0
    %496 = vmatpush2.msra.mxu0 0.0
    %497 = vmatprep.subr.mxu0 0.0
    %498 = vmatpush2.msra.mxu0 0.0
    %499 = vmatprep.subr.mxu0 0.0
    %500 = vmatpush2.msra.mxu0 0.0
    %501 = vmatprep.subr.mxu0 0.0
    %502 = vmatpush2.msra.mxu0 0.0
    %503 = vmatprep.subr.mxu0 0.0
    %504 = vmatpush2.msra.mxu0 0.0
    %505 = vmatprep.subr.mxu0 0.0
    %506 = vmatpush2.msra.mxu0 0.0
    %507 = vmatprep.subr.mxu0 0.0
    %508 = vmatpush2.msra.mxu0 0.0
    %509 = vmatprep.subr.mxu0 0.0
    %510 = vmatpush2.msra.mxu0 0.0
    %511 = vmatprep.subr.mxu0 0.0
    %512 = vmatpush2.msra.mxu0 0.0
    %513 = vmatprep.subr.mxu0 0.0
    %514 = vmatpush2.msra.mxu0 0.0
    %515 = vmatprep.subr.mxu0 0.0
    %516 = vmatpush2.msra.mxu0 0.0
    %517 = vmatprep.subr.mxu0 0.0
    %518 = vmatpush2.msra.mxu0 0.0
    %519 = vmatprep.subr.mxu0 0.0
    %520 = vmatpush2.msra.mxu0 0.0
    %521 = vmatprep.subr.mxu0 0.0
    %522 = vmatpush2.msra.mxu0 0.0
    %523 = vmatprep.subr.mxu0 0.0
    %524 = vmatpush2.msra.mxu0 0.0
    %525 = vmatprep.subr.mxu0 0.0
    %526 = vmatpush2.msra.mxu0 0.0
    %527 = vmatprep.mubr.f32.mxu0 0.0
    %528 = vmatmul.mubr.f32.gmra.mxu0 %v458
    %v529 = vpop.f32.mrf.mxu0
    %v530 = vadd.f32 0.0, %v529
    %v531 = vpop.f32.mrf.mxu0
    %532 = vmatprep.mubr.f32.mxu0 0.0
    %533 = vmatmul.mubr.f32.gmra.mxu0 %v461
    %v534 = vpop.f32.mrf.mxu0
    %v535 = vadd.f32 0.0, %v534
    %v536 = vpop.f32.mrf.mxu0
    %537 = vdwg.mxu0
    %s538 = scalar_lea.vmem %s3, 24
    %v539 = vld [vmem:[%s538] sm:$0xff]
    %v540 = vld [vmem:[%s538 + $0x8] sm:$0xff]
    %v541 = vld [vmem:[%s538 + $0x10] sm:$0xff]
    %s542 = scalar_lea.vmem %s4, 1
    %v543 = vld [vmem:[%s542] sm:$0x1]
    %v545 = vlaneseq
    %v546 = vshrl.u32 %v545, 7
    %v547 = vsub.s32 0, %v546
    %v548 = vrot.slane %v543, %v547
    %550 = vmatprep.subr.mxu0 0.0
    %551 = vmatpush1.msra.mxu0 0.0
    %552 = vmatprep.subr.mxu0 0.0
    %553 = vmatpush1.msra.mxu0 0.0
    %554 = vmatprep.subr.mxu0 0.0
    %555 = vmatpush1.msra.mxu0 0.0
    %556 = vmatprep.subr.mxu0 0.0
    %557 = vmatpush1.msra.mxu0 0.0
    %558 = vmatprep.subr.mxu0 0.0
    %559 = vmatpush1.msra.mxu0 0.0
    %560 = vmatprep.subr.mxu0 0.0
    %561 = vmatpush1.msra.mxu0 0.0
    %562 = vmatprep.subr.mxu0 0.0
    %563 = vmatpush1.msra.mxu0 0.0
    %564 = vmatprep.subr.mxu0 0.0
    %565 = vmatpush1.msra.mxu0 0.0
    %566 = vmatprep.subr.mxu0 0.0
    %567 = vmatpush1.msra.mxu0 0.0
    %568 = vmatprep.subr.mxu0 0.0
    %569 = vmatpush1.msra.mxu0 0.0
    %570 = vmatprep.subr.mxu0 0.0
    %571 = vmatpush1.msra.mxu0 0.0
    %572 = vmatprep.subr.mxu0 0.0
    %573 = vmatpush1.msra.mxu0 0.0
    %574 = vmatprep.subr.mxu0 0.0
    %575 = vmatpush1.msra.mxu0 0.0
    %576 = vmatprep.subr.mxu0 0.0
    %577 = vmatpush1.msra.mxu0 %v541
    %578 = vmatprep.subr.mxu0 0.0
    %579 = vmatpush1.msra.mxu0 %v540
    %580 = vmatprep.subr.mxu0 0.0
    %581 = vmatpush1.msra.mxu0 %v539
    %582 = vmatprep.subr.mxu0 0.0
    %583 = vmatpush2.msra.mxu0 0.0
    %584 = vmatprep.subr.mxu0 0.0
    %585 = vmatpush2.msra.mxu0 0.0
    %586 = vmatprep.subr.mxu0 0.0
    %587 = vmatpush2.msra.mxu0 0.0
    %588 = vmatprep.subr.mxu0 0.0
    %589 = vmatpush2.msra.mxu0 0.0
    %590 = vmatprep.subr.mxu0 0.0
    %591 = vmatpush2.msra.mxu0 0.0
    %592 = vmatprep.subr.mxu0 0.0
    %593 = vmatpush2.msra.mxu0 0.0
    %594 = vmatprep.subr.mxu0 0.0
    %595 = vmatpush2.msra.mxu0 0.0
    %596 = vmatprep.subr.mxu0 0.0
    %597 = vmatpush2.msra.mxu0 0.0
    %598 = vmatprep.subr.mxu0 0.0
    %599 = vmatpush2.msra.mxu0 0.0
    %600 = vmatprep.subr.mxu0 0.0
    %601 = vmatpush2.msra.mxu0 0.0
    %602 = vmatprep.subr.mxu0 0.0
    %603 = vmatpush2.msra.mxu0 0.0
    %604 = vmatprep.subr.mxu0 0.0
    %605 = vmatpush2.msra.mxu0 0.0
    %606 = vmatprep.subr.mxu0 0.0
    %607 = vmatpush2.msra.mxu0 0.0
    %608 = vmatprep.subr.mxu0 0.0
    %609 = vmatpush2.msra.mxu0 0.0
    %610 = vmatprep.subr.mxu0 0.0
    %611 = vmatpush2.msra.mxu0 0.0
    %612 = vmatprep.subr.mxu0 0.0
    %613 = vmatpush2.msra.mxu0 0.0
    %614 = vmatprep.mubr.f32.mxu0 0.0
    %615 = vmatmul.mubr.f32.gmra.mxu0 %v59
    %v616 = vpop.f32.mrf.mxu0
    %v617 = vadd.f32 %v548, %v616
    %v618 = vpop.f32.mrf.mxu0
    %619 = vmatprep.mubr.f32.mxu0 0.0
    %620 = vmatmul.mubr.f32.gmra.mxu0 %v62
    %v621 = vpop.f32.mrf.mxu0
    %v622 = vadd.f32 %v548, %v621
    %v623 = vpop.f32.mrf.mxu0
    %624 = vdwg.mxu0
    %s625 = scalar_lea.vmem %s5, 16
    %v626 = vld [vmem:[%s625] sm:$0xff]
    %v627 = vld [vmem:[%s625 + $0x8] sm:$0xff]
    %s628 = scalar_lea.vmem %s6, 1
    %v629 = vld [vmem:[%s628] sm:$0x1]
    %v631 = vlaneseq
    %v632 = vshrl.u32 %v631, 7
    %v633 = vsub.s32 0, %v632
    %v634 = vrot.slane %v629, %v633
    %636 = vmatprep.subr.mxu0 0.0
    %637 = vmatpush1.msra.mxu0 0.0
    %638 = vmatprep.subr.mxu0 0.0
    %639 = vmatpush1.msra.mxu0 0.0
    %640 = vmatprep.subr.mxu0 0.0
    %641 = vmatpush1.msra.mxu0 0.0
    %642 = vmatprep.subr.mxu0 0.0
    %643 = vmatpush1.msra.mxu0 0.0
    %644 = vmatprep.subr.mxu0 0.0
    %645 = vmatpush1.msra.mxu0 0.0
    %646 = vmatprep.subr.mxu0 0.0
    %647 = vmatpush1.msra.mxu0 0.0
    %648 = vmatprep.subr.mxu0 0.0
    %649 = vmatpush1.msra.mxu0 0.0
    %650 = vmatprep.subr.mxu0 0.0
    %651 = vmatpush1.msra.mxu0 0.0
    %652 = vmatprep.subr.mxu0 0.0
    %653 = vmatpush1.msra.mxu0 0.0
    %654 = vmatprep.subr.mxu0 0.0
    %655 = vmatpush1.msra.mxu0 0.0
    %656 = vmatprep.subr.mxu0 0.0
    %657 = vmatpush1.msra.mxu0 0.0
    %658 = vmatprep.subr.mxu0 0.0
    %659 = vmatpush1.msra.mxu0 0.0
    %660 = vmatprep.subr.mxu0 0.0
    %661 = vmatpush1.msra.mxu0 0.0
    %662 = vmatprep.subr.mxu0 0.0
    %663 = vmatpush1.msra.mxu0 0.0
    %664 = vmatprep.subr.mxu0 0.0
    %665 = vmatpush1.msra.mxu0 %v627
    %666 = vmatprep.subr.mxu0 0.0
    %667 = vmatpush1.msra.mxu0 %v626
    %668 = vmatprep.subr.mxu0 0.0
    %669 = vmatpush2.msra.mxu0 0.0
    %670 = vmatprep.subr.mxu0 0.0
    %671 = vmatpush2.msra.mxu0 0.0
    %672 = vmatprep.subr.mxu0 0.0
    %673 = vmatpush2.msra.mxu0 0.0
    %674 = vmatprep.subr.mxu0 0.0
    %675 = vmatpush2.msra.mxu0 0.0
    %676 = vmatprep.subr.mxu0 0.0
    %677 = vmatpush2.msra.mxu0 0.0
    %678 = vmatprep.subr.mxu0 0.0
    %679 = vmatpush2.msra.mxu0 0.0
    %680 = vmatprep.subr.mxu0 0.0
    %681 = vmatpush2.msra.mxu0 0.0
    %682 = vmatprep.subr.mxu0 0.0
    %683 = vmatpush2.msra.mxu0 0.0
    %684 = vmatprep.subr.mxu0 0.0
    %685 = vmatpush2.msra.mxu0 0.0
    %686 = vmatprep.subr.mxu0 0.0
    %687 = vmatpush2.msra.mxu0 0.0
    %688 = vmatprep.subr.mxu0 0.0
    %689 = vmatpush2.msra.mxu0 0.0
    %690 = vmatprep.subr.mxu0 0.0
    %691 = vmatpush2.msra.mxu0 0.0
    %692 = vmatprep.subr.mxu0 0.0
    %693 = vmatpush2.msra.mxu0 0.0
    %694 = vmatprep.subr.mxu0 0.0
    %695 = vmatpush2.msra.mxu0 0.0
    %696 = vmatprep.subr.mxu0 0.0
    %697 = vmatpush2.msra.mxu0 0.0
    %698 = vmatprep.subr.mxu0 0.0
    %699 = vmatpush2.msra.mxu0 0.0
    %700 = vmatprep.mubr.f32.mxu0 0.0
    %701 = vmatmul.mubr.f32.gmra.mxu0 %v150
    %v702 = vpop.f32.mrf.mxu0
    %v703 = vadd.f32 %v634, %v702
    %v704 = vpop.f32.mrf.mxu0
    %705 = vmatprep.mubr.f32.mxu0 0.0
    %706 = vmatmul.mubr.f32.gmra.mxu0 %v153
    %v707 = vpop.f32.mrf.mxu0
    %v708 = vadd.f32 %v634, %v707
    %v709 = vpop.f32.mrf.mxu0
    %710 = vmatprep.mubr.f32.mxu0 0.0
    %711 = vmatmul.mubr.f32.gmra.mxu0 %v156
    %v712 = vpop.f32.mrf.mxu0
    %v713 = vadd.f32 %v634, %v712
    %v714 = vpop.f32.mrf.mxu0
    %715 = vmatprep.mubr.f32.mxu0 0.0
    %716 = vmatmul.mubr.f32.gmra.mxu0 %v159
    %v717 = vpop.f32.mrf.mxu0
    %v718 = vadd.f32 %v634, %v717
    %v719 = vpop.f32.mrf.mxu0
    %720 = vdwg.mxu0
    %s721 = scalar_lea.vmem %s7, 16
    %v722 = vld [vmem:[%s721] sm:$0xff]
    %v723 = vld [vmem:[%s721 + $0x8] sm:$0xff]
    %s724 = scalar_lea.vmem %s8, 1
    %v725 = vld [vmem:[%s724] sm:$0x1]
    %v727 = vlaneseq
    %v728 = vshrl.u32 %v727, 7
    %v729 = vsub.s32 0, %v728
    %v730 = vrot.slane %v725, %v729
    %732 = vmatprep.subr.mxu0 0.0
    %733 = vmatpush1.msra.mxu0 0.0
    %734 = vmatprep.subr.mxu0 0.0
    %735 = vmatpush1.msra.mxu0 0.0
    %736 = vmatprep.subr.mxu0 0.0
    %737 = vmatpush1.msra.mxu0 0.0
    %738 = vmatprep.subr.mxu0 0.0
    %739 = vmatpush1.msra.mxu0 0.0
    %740 = vmatprep.subr.mxu0 0.0
    %741 = vmatpush1.msra.mxu0 0.0
    %742 = vmatprep.subr.mxu0 0.0
    %743 = vmatpush1.msra.mxu0 0.0
    %744 = vmatprep.subr.mxu0 0.0
    %745 = vmatpush1.msra.mxu0 0.0
    %746 = vmatprep.subr.mxu0 0.0
    %747 = vmatpush1.msra.mxu0 0.0
    %748 = vmatprep.subr.mxu0 0.0
    %749 = vmatpush1.msra.mxu0 0.0
    %750 = vmatprep.subr.mxu0 0.0
    %751 = vmatpush1.msra.mxu0 0.0
    %752 = vmatprep.subr.mxu0 0.0
    %753 = vmatpush1.msra.mxu0 0.0
    %754 = vmatprep.subr.mxu0 0.0
    %755 = vmatpush1.msra.mxu0 0.0
    %756 = vmatprep.subr.mxu0 0.0
    %757 = vmatpush1.msra.mxu0 0.0
    %758 = vmatprep.subr.mxu0 0.0
    %759 = vmatpush1.msra.mxu0 0.0
    %760 = vmatprep.subr.mxu0 0.0
    %761 = vmatpush1.msra.mxu0 %v723
    %762 = vmatprep.subr.mxu0 0.0
    %763 = vmatpush1.msra.mxu0 %v722
    %764 = vmatprep.subr.mxu0 0.0
    %765 = vmatpush2.msra.mxu0 0.0
    %766 = vmatprep.subr.mxu0 0.0
    %767 = vmatpush2.msra.mxu0 0.0
    %768 = vmatprep.subr.mxu0 0.0
    %769 = vmatpush2.msra.mxu0 0.0
    %770 = vmatprep.subr.mxu0 0.0
    %771 = vmatpush2.msra.mxu0 0.0
    %772 = vmatprep.subr.mxu0 0.0
    %773 = vmatpush2.msra.mxu0 0.0
    %774 = vmatprep.subr.mxu0 0.0
    %775 = vmatpush2.msra.mxu0 0.0
    %776 = vmatprep.subr.mxu0 0.0
    %777 = vmatpush2.msra.mxu0 0.0
    %778 = vmatprep.subr.mxu0 0.0
    %779 = vmatpush2.msra.mxu0 0.0
    %780 = vmatprep.subr.mxu0 0.0
    %781 = vmatpush2.msra.mxu0 0.0
    %782 = vmatprep.subr.mxu0 0.0
    %783 = vmatpush2.msra.mxu0 0.0
    %784 = vmatprep.subr.mxu0 0.0
    %785 = vmatpush2.msra.mxu0 0.0
    %786 = vmatprep.subr.mxu0 0.0
    %787 = vmatpush2.msra.mxu0 0.0
    %788 = vmatprep.subr.mxu0 0.0
    %789 = vmatpush2.msra.mxu0 0.0
    %790 = vmatprep.subr.mxu0 0.0
    %791 = vmatpush2.msra.mxu0 0.0
    %792 = vmatprep.subr.mxu0 0.0
    %793 = vmatpush2.msra.mxu0 0.0
    %794 = vmatprep.subr.mxu0 0.0
    %795 = vmatpush2.msra.mxu0 0.0
    %796 = vmatprep.mubr.f32.mxu0 0.0
    %797 = vmatmul.mubr.f32.gmra.mxu0 %v150
    %v798 = vpop.f32.mrf.mxu0
    %v799 = vadd.f32 %v730, %v798
    %v800 = vpop.f32.mrf.mxu0
    %801 = vmatprep.mubr.f32.mxu0 0.0
    %802 = vmatmul.mubr.f32.gmra.mxu0 %v153
    %v803 = vpop.f32.mrf.mxu0
    %v804 = vadd.f32 %v730, %v803
    %v805 = vpop.f32.mrf.mxu0
    %806 = vmatprep.mubr.f32.mxu0 0.0
    %807 = vmatmul.mubr.f32.gmra.mxu0 %v156
    %v808 = vpop.f32.mrf.mxu0
    %v809 = vadd.f32 %v730, %v808
    %v810 = vpop.f32.mrf.mxu0
    %811 = vmatprep.mubr.f32.mxu0 0.0
    %812 = vmatmul.mubr.f32.gmra.mxu0 %v159
    %v813 = vpop.f32.mrf.mxu0
    %v814 = vadd.f32 %v730, %v813
    %v815 = vpop.f32.mrf.mxu0
    %816 = vdwg.mxu0
    %v818 = vsel %vm340, %v617, 0
    %v821 = vsel %vm340, %v622, 0
    %v824 = vsel %vm340, %v703, 0
    %v827 = vsel %vm340, %v708, 0
    %v830 = vsel %vm340, %v713, 0
    %v833 = vsel %vm340, %v718, 0
    %835 = vmatprep.subr.mxu0 0.0
    %836 = vmatpush1.xpose.msra.mxu0 0.0
    %837 = vmatprep.subr.mxu0 0.0
    %838 = vmatpush1.xpose.msra.mxu0 0.0
    %839 = vmatprep.subr.mxu0 0.0
    %840 = vmatpush1.xpose.msra.mxu0 0.0
    %841 = vmatprep.subr.mxu0 0.0
    %842 = vmatpush1.xpose.msra.mxu0 0.0
    %843 = vmatprep.subr.mxu0 0.0
    %844 = vmatpush1.xpose.msra.mxu0 0.0
    %845 = vmatprep.subr.mxu0 0.0
    %846 = vmatpush1.xpose.msra.mxu0 0.0
    %847 = vmatprep.subr.mxu0 0.0
    %848 = vmatpush1.xpose.msra.mxu0 0.0
    %849 = vmatprep.subr.mxu0 0.0
    %850 = vmatpush1.xpose.msra.mxu0 0.0
    %851 = vmatprep.subr.mxu0 0.0
    %852 = vmatpush1.xpose.msra.mxu0 0.0
    %853 = vmatprep.subr.mxu0 0.0
    %854 = vmatpush1.xpose.msra.mxu0 0.0
    %855 = vmatprep.subr.mxu0 0.0
    %856 = vmatpush1.xpose.msra.mxu0 0.0
    %857 = vmatprep.subr.mxu0 0.0
    %858 = vmatpush1.xpose.msra.mxu0 0.0
    %859 = vmatprep.subr.mxu0 0.0
    %860 = vmatpush1.xpose.msra.mxu0 %v833
    %861 = vmatprep.subr.mxu0 0.0
    %862 = vmatpush1.xpose.msra.mxu0 %v830
    %863 = vmatprep.subr.mxu0 0.0
    %864 = vmatpush1.xpose.msra.mxu0 %v827
    %865 = vmatprep.subr.mxu0 0.0
    %866 = vmatpush1.xpose.msra.mxu0 %v824
    %867 = vmatprep.subr.mxu0 0.0
    %868 = vmatpush2.xpose.msra.mxu0 0.0
    %869 = vmatprep.subr.mxu0 0.0
    %870 = vmatpush2.xpose.msra.mxu0 0.0
    %871 = vmatprep.subr.mxu0 0.0
    %872 = vmatpush2.xpose.msra.mxu0 0.0
    %873 = vmatprep.subr.mxu0 0.0
    %874 = vmatpush2.xpose.msra.mxu0 0.0
    %875 = vmatprep.subr.mxu0 0.0
    %876 = vmatpush2.xpose.msra.mxu0 0.0
    %877 = vmatprep.subr.mxu0 0.0
    %878 = vmatpush2.xpose.msra.mxu0 0.0
    %879 = vmatprep.subr.mxu0 0.0
    %880 = vmatpush2.xpose.msra.mxu0 0.0
    %881 = vmatprep.subr.mxu0 0.0
    %882 = vmatpush2.xpose.msra.mxu0 0.0
    %883 = vmatprep.subr.mxu0 0.0
    %884 = vmatpush2.xpose.msra.mxu0 0.0
    %885 = vmatprep.subr.mxu0 0.0
    %886 = vmatpush2.xpose.msra.mxu0 0.0
    %887 = vmatprep.subr.mxu0 0.0
    %888 = vmatpush2.xpose.msra.mxu0 0.0
    %889 = vmatprep.subr.mxu0 0.0
    %890 = vmatpush2.xpose.msra.mxu0 0.0
    %891 = vmatprep.subr.mxu0 0.0
    %892 = vmatpush2.xpose.msra.mxu0 0.0
    %893 = vmatprep.subr.mxu0 0.0
    %894 = vmatpush2.xpose.msra.mxu0 0.0
    %895 = vmatprep.subr.mxu0 0.0
    %896 = vmatpush2.xpose.msra.mxu0 0.0
    %897 = vmatprep.subr.mxu0 0.0
    %898 = vmatpush2.xpose.msra.mxu0 0.0
    %899 = vmatprep.mubr.f32.mxu0 0.0
    %900 = vmatmul.mubr.f32.gmra.mxu0 %v818
    %v901 = vpop.f32.mrf.mxu0
    %v902 = vadd.f32 %v45, %v901
    %v903 = vpop.f32.mrf.mxu0
    %904 = vmatprep.mubr.f32.mxu0 0.0
    %905 = vmatmul.mubr.f32.gmra.mxu0 %v821
    %v906 = vpop.f32.mrf.mxu0
    %v907 = vadd.f32 %v46, %v906
    %v908 = vpop.f32.mrf.mxu0
    %909 = vdwg.mxu0
    %v910 = vsel %vm434, %v902, -inf
    %911 = vmax.xlane.f32.xlu0 %v910
    %v912 = vpop.xlane.xlu0 %911
    %v913 = vsel %vm434, %v907, -inf
    %914 = vmax.xlane.f32.xlu0 %v913
    %v915 = vpop.xlane.xlu0 %914
    %v916 = vsub.f32 %v902, %v912
    %v917 = vsub.f32 %v907, %v915
    %v918 = vmul.f32 %v916, 1.442695
    %v919 = vpow.pop %v918
    %v920 = vmul.f32 %v917, 1.442695
    %v921 = vpow.pop %v920
    %v922 = vsel %vm434, %v919, 0.0
    %923 = vadd.xlane.f32.xlu0 %v922
    %v924 = vpop.xlane.xlu0 %923
    %v925 = vsel %vm434, %v921, 0.0
    %926 = vadd.xlane.f32.xlu0 %v925
    %v927 = vpop.xlane.xlu0 %926
    %v928 = vrcp.pop %v924
    %v929 = vrcp.pop %v927
    %v930 = vmul.f32 %v919, %v928
    %v931 = vmul.f32 %v921, %v929
    %v933 = vsel %vm434, %v930, 0
    %v936 = vsel %vm434, %v931, 0
    %938 = vmatprep.subr.mxu0 0.0
    %939 = vmatpush1.msra.mxu0 0.0
    %940 = vmatprep.subr.mxu0 0.0
    %941 = vmatpush1.msra.mxu0 0.0
    %942 = vmatprep.subr.mxu0 0.0
    %943 = vmatpush1.msra.mxu0 0.0
    %944 = vmatprep.subr.mxu0 0.0
    %945 = vmatpush1.msra.mxu0 0.0
    %946 = vmatprep.subr.mxu0 0.0
    %947 = vmatpush1.msra.mxu0 0.0
    %948 = vmatprep.subr.mxu0 0.0
    %949 = vmatpush1.msra.mxu0 0.0
    %950 = vmatprep.subr.mxu0 0.0
    %951 = vmatpush1.msra.mxu0 0.0
    %952 = vmatprep.subr.mxu0 0.0
    %953 = vmatpush1.msra.mxu0 0.0
    %954 = vmatprep.subr.mxu0 0.0
    %955 = vmatpush1.msra.mxu0 0.0
    %956 = vmatprep.subr.mxu0 0.0
    %957 = vmatpush1.msra.mxu0 0.0
    %958 = vmatprep.subr.mxu0 0.0
    %959 = vmatpush1.msra.mxu0 0.0
    %960 = vmatprep.subr.mxu0 0.0
    %961 = vmatpush1.msra.mxu0 0.0
    %962 = vmatprep.subr.mxu0 0.0
    %963 = vmatpush1.msra.mxu0 %v814
    %964 = vmatprep.subr.mxu0 0.0
    %965 = vmatpush1.msra.mxu0 %v809
    %966 = vmatprep.subr.mxu0 0.0
    %967 = vmatpush1.msra.mxu0 %v804
    %968 = vmatprep.subr.mxu0 0.0
    %969 = vmatpush1.msra.mxu0 %v799
    %970 = vmatprep.subr.mxu0 0.0
    %971 = vmatpush2.msra.mxu0 0.0
    %972 = vmatprep.subr.mxu0 0.0
    %973 = vmatpush2.msra.mxu0 0.0
    %974 = vmatprep.subr.mxu0 0.0
    %975 = vmatpush2.msra.mxu0 0.0
    %976 = vmatprep.subr.mxu0 0.0
    %977 = vmatpush2.msra.mxu0 0.0
    %978 = vmatprep.subr.mxu0 0.0
    %979 = vmatpush2.msra.mxu0 0.0
    %980 = vmatprep.subr.mxu0 0.0
    %981 = vmatpush2.msra.mxu0 0.0
    %982 = vmatprep.subr.mxu0 0.0
    %983 = vmatpush2.msra.mxu0 0.0
    %984 = vmatprep.subr.mxu0 0.0
    %985 = vmatpush2.msra.mxu0 0.0
    %986 = vmatprep.subr.mxu0 0.0
    %987 = vmatpush2.msra.mxu0 0.0
    %988 = vmatprep.subr.mxu0 0.0
    %989 = vmatpush2.msra.mxu0 0.0
    %990 = vmatprep.subr.mxu0 0.0
    %991 = vmatpush2.msra.mxu0 0.0
    %992 = vmatprep.subr.mxu0 0.0
    %993 = vmatpush2.msra.mxu0 0.0
    %994 = vmatprep.subr.mxu0 0.0
    %995 = vmatpush2.msra.mxu0 0.0
    %996 = vmatprep.subr.mxu0 0.0
    %997 = vmatpush2.msra.mxu0 0.0
    %998 = vmatprep.subr.mxu0 0.0
    %999 = vmatpush2.msra.mxu0 0.0
    %1000 = vmatprep.subr.mxu0 0.0
    %1001 = vmatpush2.msra.mxu0 0.0
    %1002 = vmatprep.mubr.f32.mxu0 0.0
    %1003 = vmatmul.mubr.f32.gmra.mxu0 %v933
    %v1004 = vpop.f32.mrf.mxu0
    %v1005 = vadd.f32 0.0, %v1004
    %v1006 = vpop.f32.mrf.mxu0
    %1007 = vmatprep.mubr.f32.mxu0 0.0
    %1008 = vmatmul.mubr.f32.gmra.mxu0 %v936
    %v1009 = vpop.f32.mrf.mxu0
    %v1010 = vadd.f32 0.0, %v1009
    %v1011 = vpop.f32.mrf.mxu0
    %1012 = vdwg.mxu0
    %s1013 = scalar_lea.vmem %s3, 48
    %v1014 = vld [vmem:[%s1013] sm:$0xff]
    %v1015 = vld [vmem:[%s1013 + $0x8] sm:$0xff]
    %v1016 = vld [vmem:[%s1013 + $0x10] sm:$0xff]
    %s1017 = scalar_lea.vmem %s4, 2
    %v1018 = vld [vmem:[%s1017] sm:$0x1]
    %v1020 = vlaneseq
    %v1021 = vshrl.u32 %v1020, 7
    %v1022 = vsub.s32 0, %v1021
    %v1023 = vrot.slane %v1018, %v1022
    %1025 = vmatprep.subr.mxu0 0.0
    %1026 = vmatpush1.msra.mxu0 0.0
    %1027 = vmatprep.subr.mxu0 0.0
    %1028 = vmatpush1.msra.mxu0 0.0
    %1029 = vmatprep.subr.mxu0 0.0
    %1030 = vmatpush1.msra.mxu0 0.0
    %1031 = vmatprep.subr.mxu0 0.0
    %1032 = vmatpush1.msra.mxu0 0.0
    %1033 = vmatprep.subr.mxu0 0.0
    %1034 = vmatpush1.msra.mxu0 0.0
    %1035 = vmatprep.subr.mxu0 0.0
    %1036 = vmatpush1.msra.mxu0 0.0
    %1037 = vmatprep.subr.mxu0 0.0
    %1038 = vmatpush1.msra.mxu0 0.0
    %1039 = vmatprep.subr.mxu0 0.0
    %1040 = vmatpush1.msra.mxu0 0.0
    %1041 = vmatprep.subr.mxu0 0.0
    %1042 = vmatpush1.msra.mxu0 0.0
    %1043 = vmatprep.subr.mxu0 0.0
    %1044 = vmatpush1.msra.mxu0 0.0
    %1045 = vmatprep.subr.mxu0 0.0
    %1046 = vmatpush1.msra.mxu0 0.0
    %1047 = vmatprep.subr.mxu0 0.0
    %1048 = vmatpush1.msra.mxu0 0.0
    %1049 = vmatprep.subr.mxu0 0.0
    %1050 = vmatpush1.msra.mxu0 0.0
    %1051 = vmatprep.subr.mxu0 0.0
    %1052 = vmatpush1.msra.mxu0 %v1016
    %1053 = vmatprep.subr.mxu0 0.0
    %1054 = vmatpush1.msra.mxu0 %v1015
    %1055 = vmatprep.subr.mxu0 0.0
    %1056 = vmatpush1.msra.mxu0 %v1014
    %1057 = vmatprep.subr.mxu0 0.0
    %1058 = vmatpush2.msra.mxu0 0.0
    %1059 = vmatprep.subr.mxu0 0.0
    %1060 = vmatpush2.msra.mxu0 0.0
    %1061 = vmatprep.subr.mxu0 0.0
    %1062 = vmatpush2.msra.mxu0 0.0
    %1063 = vmatprep.subr.mxu0 0.0
    %1064 = vmatpush2.msra.mxu0 0.0
    %1065 = vmatprep.subr.mxu0 0.0
    %1066 = vmatpush2.msra.mxu0 0.0
    %1067 = vmatprep.subr.mxu0 0.0
    %1068 = vmatpush2.msra.mxu0 0.0
    %1069 = vmatprep.subr.mxu0 0.0
    %1070 = vmatpush2.msra.mxu0 0.0
    %1071 = vmatprep.subr.mxu0 0.0
    %1072 = vmatpush2.msra.mxu0 0.0
    %1073 = vmatprep.subr.mxu0 0.0
    %1074 = vmatpush2.msra.mxu0 0.0
    %1075 = vmatprep.subr.mxu0 0.0
    %1076 = vmatpush2.msra.mxu0 0.0
    %1077 = vmatprep.subr.mxu0 0.0
    %1078 = vmatpush2.msra.mxu0 0.0
    %1079 = vmatprep.subr.mxu0 0.0
    %1080 = vmatpush2.msra.mxu0 0.0
    %1081 = vmatprep.subr.mxu0 0.0
    %1082 = vmatpush2.msra.mxu0 0.0
    %1083 = vmatprep.subr.mxu0 0.0
    %1084 = vmatpush2.msra.mxu0 0.0
    %1085 = vmatprep.subr.mxu0 0.0
    %1086 = vmatpush2.msra.mxu0 0.0
    %1087 = vmatprep.subr.mxu0 0.0
    %1088 = vmatpush2.msra.mxu0 0.0
    %1089 = vmatprep.mubr.f32.mxu0 0.0
    %1090 = vmatmul.mubr.f32.gmra.mxu0 %v59
    %v1091 = vpop.f32.mrf.mxu0
    %v1092 = vadd.f32 %v1023, %v1091
    %v1093 = vpop.f32.mrf.mxu0
    %1094 = vmatprep.mubr.f32.mxu0 0.0
    %1095 = vmatmul.mubr.f32.gmra.mxu0 %v62
    %v1096 = vpop.f32.mrf.mxu0
    %v1097 = vadd.f32 %v1023, %v1096
    %v1098 = vpop.f32.mrf.mxu0
    %1099 = vdwg.mxu0
    %s1100 = scalar_lea.vmem %s5, 32
    %v1101 = vld [vmem:[%s1100] sm:$0xff]
    %v1102 = vld [vmem:[%s1100 + $0x8] sm:$0xff]
    %s1103 = scalar_lea.vmem %s6, 2
    %v1104 = vld [vmem:[%s1103] sm:$0x1]
    %v1106 = vlaneseq
    %v1107 = vshrl.u32 %v1106, 7
    %v1108 = vsub.s32 0, %v1107
    %v1109 = vrot.slane %v1104, %v1108
    %1111 = vmatprep.subr.mxu0 0.0
    %1112 = vmatpush1.msra.mxu0 0.0
    %1113 = vmatprep.subr.mxu0 0.0
    %1114 = vmatpush1.msra.mxu0 0.0
    %1115 = vmatprep.subr.mxu0 0.0
    %1116 = vmatpush1.msra.mxu0 0.0
    %1117 = vmatprep.subr.mxu0 0.0
    %1118 = vmatpush1.msra.mxu0 0.0
    %1119 = vmatprep.subr.mxu0 0.0
    %1120 = vmatpush1.msra.mxu0 0.0
    %1121 = vmatprep.subr.mxu0 0.0
    %1122 = vmatpush1.msra.mxu0 0.0
    %1123 = vmatprep.subr.mxu0 0.0
    %1124 = vmatpush1.msra.mxu0 0.0
    %1125 = vmatprep.subr.mxu0 0.0
    %1126 = vmatpush1.msra.mxu0 0.0
    %1127 = vmatprep.subr.mxu0 0.0
    %1128 = vmatpush1.msra.mxu0 0.0
    %1129 = vmatprep.subr.mxu0 0.0
    %1130 = vmatpush1.msra.mxu0 0.0
    %1131 = vmatprep.subr.mxu0 0.0
    %1132 = vmatpush1.msra.mxu0 0.0
    %1133 = vmatprep.subr.mxu0 0.0
    %1134 = vmatpush1.msra.mxu0 0.0
    %1135 = vmatprep.subr.mxu0 0.0
    %1136 = vmatpush1.msra.mxu0 0.0
    %1137 = vmatprep.subr.mxu0 0.0
    %1138 = vmatpush1.msra.mxu0 0.0
    %1139 = vmatprep.subr.mxu0 0.0
    %1140 = vmatpush1.msra.mxu0 %v1102
    %1141 = vmatprep.subr.mxu0 0.0
    %1142 = vmatpush1.msra.mxu0 %v1101
    %1143 = vmatprep.subr.mxu0 0.0
    %1144 = vmatpush2.msra.mxu0 0.0
    %1145 = vmatprep.subr.mxu0 0.0
    %1146 = vmatpush2.msra.mxu0 0.0
    %1147 = vmatprep.subr.mxu0 0.0
    %1148 = vmatpush2.msra.mxu0 0.0
    %1149 = vmatprep.subr.mxu0 0.0
    %1150 = vmatpush2.msra.mxu0 0.0
    %1151 = vmatprep.subr.mxu0 0.0
    %1152 = vmatpush2.msra.mxu0 0.0
    %1153 = vmatprep.subr.mxu0 0.0
    %1154 = vmatpush2.msra.mxu0 0.0
    %1155 = vmatprep.subr.mxu0 0.0
    %1156 = vmatpush2.msra.mxu0 0.0
    %1157 = vmatprep.subr.mxu0 0.0
    %1158 = vmatpush2.msra.mxu0 0.0
    %1159 = vmatprep.subr.mxu0 0.0
    %1160 = vmatpush2.msra.mxu0 0.0
    %1161 = vmatprep.subr.mxu0 0.0
    %1162 = vmatpush2.msra.mxu0 0.0
    %1163 = vmatprep.subr.mxu0 0.0
    %1164 = vmatpush2.msra.mxu0 0.0
    %1165 = vmatprep.subr.mxu0 0.0
    %1166 = vmatpush2.msra.mxu0 0.0
    %1167 = vmatprep.subr.mxu0 0.0
    %1168 = vmatpush2.msra.mxu0 0.0
    %1169 = vmatprep.subr.mxu0 0.0
    %1170 = vmatpush2.msra.mxu0 0.0
    %1171 = vmatprep.subr.mxu0 0.0
    %1172 = vmatpush2.msra.mxu0 0.0
    %1173 = vmatprep.subr.mxu0 0.0
    %1174 = vmatpush2.msra.mxu0 0.0
    %1175 = vmatprep.mubr.f32.mxu0 0.0
    %1176 = vmatmul.mubr.f32.gmra.mxu0 %v150
    %v1177 = vpop.f32.mrf.mxu0
    %v1178 = vadd.f32 %v1109, %v1177
    %v1179 = vpop.f32.mrf.mxu0
    %1180 = vmatprep.mubr.f32.mxu0 0.0
    %1181 = vmatmul.mubr.f32.gmra.mxu0 %v153
    %v1182 = vpop.f32.mrf.mxu0
    %v1183 = vadd.f32 %v1109, %v1182
    %v1184 = vpop.f32.mrf.mxu0
    %1185 = vmatprep.mubr.f32.mxu0 0.0
    %1186 = vmatmul.mubr.f32.gmra.mxu0 %v156
    %v1187 = vpop.f32.mrf.mxu0
    %v1188 = vadd.f32 %v1109, %v1187
    %v1189 = vpop.f32.mrf.mxu0
    %1190 = vmatprep.mubr.f32.mxu0 0.0
    %1191 = vmatmul.mubr.f32.gmra.mxu0 %v159
    %v1192 = vpop.f32.mrf.mxu0
    %v1193 = vadd.f32 %v1109, %v1192
    %v1194 = vpop.f32.mrf.mxu0
    %1195 = vdwg.mxu0
    %s1196 = scalar_lea.vmem %s7, 32
    %v1197 = vld [vmem:[%s1196] sm:$0xff]
    %v1198 = vld [vmem:[%s1196 + $0x8] sm:$0xff]
    %s1199 = scalar_lea.vmem %s8, 2
    %v1200 = vld [vmem:[%s1199] sm:$0x1]
    %v1202 = vlaneseq
    %v1203 = vshrl.u32 %v1202, 7
    %v1204 = vsub.s32 0, %v1203
    %v1205 = vrot.slane %v1200, %v1204
    %1207 = vmatprep.subr.mxu0 0.0
    %1208 = vmatpush1.msra.mxu0 0.0
    %1209 = vmatprep.subr.mxu0 0.0
    %1210 = vmatpush1.msra.mxu0 0.0
    %1211 = vmatprep.subr.mxu0 0.0
    %1212 = vmatpush1.msra.mxu0 0.0
    %1213 = vmatprep.subr.mxu0 0.0
    %1214 = vmatpush1.msra.mxu0 0.0
    %1215 = vmatprep.subr.mxu0 0.0
    %1216 = vmatpush1.msra.mxu0 0.0
    %1217 = vmatprep.subr.mxu0 0.0
    %1218 = vmatpush1.msra.mxu0 0.0
    %1219 = vmatprep.subr.mxu0 0.0
    %1220 = vmatpush1.msra.mxu0 0.0
    %1221 = vmatprep.subr.mxu0 0.0
    %1222 = vmatpush1.msra.mxu0 0.0
    %1223 = vmatprep.subr.mxu0 0.0
    %1224 = vmatpush1.msra.mxu0 0.0
    %1225 = vmatprep.subr.mxu0 0.0
    %1226 = vmatpush1.msra.mxu0 0.0
    %1227 = vmatprep.subr.mxu0 0.0
    %1228 = vmatpush1.msra.mxu0 0.0
    %1229 = vmatprep.subr.mxu0 0.0
    %1230 = vmatpush1.msra.mxu0 0.0
    %1231 = vmatprep.subr.mxu0 0.0
    %1232 = vmatpush1.msra.mxu0 0.0
    %1233 = vmatprep.subr.mxu0 0.0
    %1234 = vmatpush1.msra.mxu0 0.0
    %1235 = vmatprep.subr.mxu0 0.0
    %1236 = vmatpush1.msra.mxu0 %v1198
    %1237 = vmatprep.subr.mxu0 0.0
    %1238 = vmatpush1.msra.mxu0 %v1197
    %1239 = vmatprep.subr.mxu0 0.0
    %1240 = vmatpush2.msra.mxu0 0.0
    %1241 = vmatprep.subr.mxu0 0.0
    %1242 = vmatpush2.msra.mxu0 0.0
    %1243 = vmatprep.subr.mxu0 0.0
    %1244 = vmatpush2.msra.mxu0 0.0
    %1245 = vmatprep.subr.mxu0 0.0
    %1246 = vmatpush2.msra.mxu0 0.0
    %1247 = vmatprep.subr.mxu0 0.0
    %1248 = vmatpush2.msra.mxu0 0.0
    %1249 = vmatprep.subr.mxu0 0.0
    %1250 = vmatpush2.msra.mxu0 0.0
    %1251 = vmatprep.subr.mxu0 0.0
    %1252 = vmatpush2.msra.mxu0 0.0
    %1253 = vmatprep.subr.mxu0 0.0
    %1254 = vmatpush2.msra.mxu0 0.0
    %1255 = vmatprep.subr.mxu0 0.0
    %1256 = vmatpush2.msra.mxu0 0.0
    %1257 = vmatprep.subr.mxu0 0.0
    %1258 = vmatpush2.msra.mxu0 0.0
    %1259 = vmatprep.subr.mxu0 0.0
    %1260 = vmatpush2.msra.mxu0 0.0
    %1261 = vmatprep.subr.mxu0 0.0
    %1262 = vmatpush2.msra.mxu0 0.0
    %1263 = vmatprep.subr.mxu0 0.0
    %1264 = vmatpush2.msra.mxu0 0.0
    %1265 = vmatprep.subr.mxu0 0.0
    %1266 = vmatpush2.msra.mxu0 0.0
    %1267 = vmatprep.subr.mxu0 0.0
    %1268 = vmatpush2.msra.mxu0 0.0
    %1269 = vmatprep.subr.mxu0 0.0
    %1270 = vmatpush2.msra.mxu0 0.0
    %1271 = vmatprep.mubr.f32.mxu0 0.0
    %1272 = vmatmul.mubr.f32.gmra.mxu0 %v150
    %v1273 = vpop.f32.mrf.mxu0
    %v1274 = vadd.f32 %v1205, %v1273
    %v1275 = vpop.f32.mrf.mxu0
    %1276 = vmatprep.mubr.f32.mxu0 0.0
    %1277 = vmatmul.mubr.f32.gmra.mxu0 %v153
    %v1278 = vpop.f32.mrf.mxu0
    %v1279 = vadd.f32 %v1205, %v1278
    %v1280 = vpop.f32.mrf.mxu0
    %1281 = vmatprep.mubr.f32.mxu0 0.0
    %1282 = vmatmul.mubr.f32.gmra.mxu0 %v156
    %v1283 = vpop.f32.mrf.mxu0
    %v1284 = vadd.f32 %v1205, %v1283
    %v1285 = vpop.f32.mrf.mxu0
    %1286 = vmatprep.mubr.f32.mxu0 0.0
    %1287 = vmatmul.mubr.f32.gmra.mxu0 %v159
    %v1288 = vpop.f32.mrf.mxu0
    %v1289 = vadd.f32 %v1205, %v1288
    %v1290 = vpop.f32.mrf.mxu0
    %1291 = vdwg.mxu0
    %v1293 = vsel %vm340, %v1092, 0
    %v1296 = vsel %vm340, %v1097, 0
    %v1299 = vsel %vm340, %v1178, 0
    %v1302 = vsel %vm340, %v1183, 0
    %v1305 = vsel %vm340, %v1188, 0
    %v1308 = vsel %vm340, %v1193, 0
    %1310 = vmatprep.subr.mxu0 0.0
    %1311 = vmatpush1.xpose.msra.mxu0 0.0
    %1312 = vmatprep.subr.mxu0 0.0
    %1313 = vmatpush1.xpose.msra.mxu0 0.0
    %1314 = vmatprep.subr.mxu0 0.0
    %1315 = vmatpush1.xpose.msra.mxu0 0.0
    %1316 = vmatprep.subr.mxu0 0.0
    %1317 = vmatpush1.xpose.msra.mxu0 0.0
    %1318 = vmatprep.subr.mxu0 0.0
    %1319 = vmatpush1.xpose.msra.mxu0 0.0
    %1320 = vmatprep.subr.mxu0 0.0
    %1321 = vmatpush1.xpose.msra.mxu0 0.0
    %1322 = vmatprep.subr.mxu0 0.0
    %1323 = vmatpush1.xpose.msra.mxu0 0.0
    %1324 = vmatprep.subr.mxu0 0.0
    %1325 = vmatpush1.xpose.msra.mxu0 0.0
    %1326 = vmatprep.subr.mxu0 0.0
    %1327 = vmatpush1.xpose.msra.mxu0 0.0
    %1328 = vmatprep.subr.mxu0 0.0
    %1329 = vmatpush1.xpose.msra.mxu0 0.0
    %1330 = vmatprep.subr.mxu0 0.0
    %1331 = vmatpush1.xpose.msra.mxu0 0.0
    %1332 = vmatprep.subr.mxu0 0.0
    %1333 = vmatpush1.xpose.msra.mxu0 0.0
    %1334 = vmatprep.subr.mxu0 0.0
    %1335 = vmatpush1.xpose.msra.mxu0 %v1308
    %1336 = vmatprep.subr.mxu0 0.0
    %1337 = vmatpush1.xpose.msra.mxu0 %v1305
    %1338 = vmatprep.subr.mxu0 0.0
    %1339 = vmatpush1.xpose.msra.mxu0 %v1302
    %1340 = vmatprep.subr.mxu0 0.0
    %1341 = vmatpush1.xpose.msra.mxu0 %v1299
    %1342 = vmatprep.subr.mxu0 0.0
    %1343 = vmatpush2.xpose.msra.mxu0 0.0
    %1344 = vmatprep.subr.mxu0 0.0
    %1345 = vmatpush2.xpose.msra.mxu0 0.0
    %1346 = vmatprep.subr.mxu0 0.0
    %1347 = vmatpush2.xpose.msra.mxu0 0.0
    %1348 = vmatprep.subr.mxu0 0.0
    %1349 = vmatpush2.xpose.msra.mxu0 0.0
    %1350 = vmatprep.subr.mxu0 0.0
    %1351 = vmatpush2.xpose.msra.mxu0 0.0
    %1352 = vmatprep.subr.mxu0 0.0
    %1353 = vmatpush2.xpose.msra.mxu0 0.0
    %1354 = vmatprep.subr.mxu0 0.0
    %1355 = vmatpush2.xpose.msra.mxu0 0.0
    %1356 = vmatprep.subr.mxu0 0.0
    %1357 = vmatpush2.xpose.msra.mxu0 0.0
    %1358 = vmatprep.subr.mxu0 0.0
    %1359 = vmatpush2.xpose.msra.mxu0 0.0
    %1360 = vmatprep.subr.mxu0 0.0
    %1361 = vmatpush2.xpose.msra.mxu0 0.0
    %1362 = vmatprep.subr.mxu0 0.0
    %1363 = vmatpush2.xpose.msra.mxu0 0.0
    %1364 = vmatprep.subr.mxu0 0.0
    %1365 = vmatpush2.xpose.msra.mxu0 0.0
    %1366 = vmatprep.subr.mxu0 0.0
    %1367 = vmatpush2.xpose.msra.mxu0 0.0
    %1368 = vmatprep.subr.mxu0 0.0
    %1369 = vmatpush2.xpose.msra.mxu0 0.0
    %1370 = vmatprep.subr.mxu0 0.0
    %1371 = vmatpush2.xpose.msra.mxu0 0.0
    %1372 = vmatprep.subr.mxu0 0.0
    %1373 = vmatpush2.xpose.msra.mxu0 0.0
    %1374 = vmatprep.mubr.f32.mxu0 0.0
    %1375 = vmatmul.mubr.f32.gmra.mxu0 %v1293
    %v1376 = vpop.f32.mrf.mxu0
    %v1377 = vadd.f32 %v45, %v1376
    %v1378 = vpop.f32.mrf.mxu0
    %1379 = vmatprep.mubr.f32.mxu0 0.0
    %1380 = vmatmul.mubr.f32.gmra.mxu0 %v1296
    %v1381 = vpop.f32.mrf.mxu0
    %v1382 = vadd.f32 %v46, %v1381
    %v1383 = vpop.f32.mrf.mxu0
    %1384 = vdwg.mxu0
    %v1385 = vsel %vm434, %v1377, -inf
    %1386 = vmax.xlane.f32.xlu0 %v1385
    %v1387 = vpop.xlane.xlu0 %1386
    %v1388 = vsel %vm434, %v1382, -inf
    %1389 = vmax.xlane.f32.xlu0 %v1388
    %v1390 = vpop.xlane.xlu0 %1389
    %v1391 = vsub.f32 %v1377, %v1387
    %v1392 = vsub.f32 %v1382, %v1390
    %v1393 = vmul.f32 %v1391, 1.442695
    %v1394 = vpow.pop %v1393
    %v1395 = vmul.f32 %v1392, 1.442695
    %v1396 = vpow.pop %v1395
    %v1397 = vsel %vm434, %v1394, 0.0
    %1398 = vadd.xlane.f32.xlu0 %v1397
    %v1399 = vpop.xlane.xlu0 %1398
    %v1400 = vsel %vm434, %v1396, 0.0
    %1401 = vadd.xlane.f32.xlu0 %v1400
    %v1402 = vpop.xlane.xlu0 %1401
    %v1403 = vrcp.pop %v1399
    %v1404 = vrcp.pop %v1402
    %v1405 = vmul.f32 %v1394, %v1403
    %v1406 = vmul.f32 %v1396, %v1404
    %v1408 = vsel %vm434, %v1405, 0
    %v1411 = vsel %vm434, %v1406, 0
    %1413 = vmatprep.subr.mxu0 0.0
    %1414 = vmatpush1.msra.mxu0 0.0
    %1415 = vmatprep.subr.mxu0 0.0
    %1416 = vmatpush1.msra.mxu0 0.0
    %1417 = vmatprep.subr.mxu0 0.0
    %1418 = vmatpush1.msra.mxu0 0.0
    %1419 = vmatprep.subr.mxu0 0.0
    %1420 = vmatpush1.msra.mxu0 0.0
    %1421 = vmatprep.subr.mxu0 0.0
    %1422 = vmatpush1.msra.mxu0 0.0
    %1423 = vmatprep.subr.mxu0 0.0
    %1424 = vmatpush1.msra.mxu0 0.0
    %1425 = vmatprep.subr.mxu0 0.0
    %1426 = vmatpush1.msra.mxu0 0.0
    %1427 = vmatprep.subr.mxu0 0.0
    %1428 = vmatpush1.msra.mxu0 0.0
    %1429 = vmatprep.subr.mxu0 0.0
    %1430 = vmatpush1.msra.mxu0 0.0
    %1431 = vmatprep.subr.mxu0 0.0
    %1432 = vmatpush1.msra.mxu0 0.0
    %1433 = vmatprep.subr.mxu0 0.0
    %1434 = vmatpush1.msra.mxu0 0.0
    %1435 = vmatprep.subr.mxu0 0.0
    %1436 = vmatpush1.msra.mxu0 0.0
    %1437 = vmatprep.subr.mxu0 0.0
    %1438 = vmatpush1.msra.mxu0 %v1289
    %1439 = vmatprep.subr.mxu0 0.0
    %1440 = vmatpush1.msra.mxu0 %v1284
    %1441 = vmatprep.subr.mxu0 0.0
    %1442 = vmatpush1.msra.mxu0 %v1279
    %1443 = vmatprep.subr.mxu0 0.0
    %1444 = vmatpush1.msra.mxu0 %v1274
    %1445 = vmatprep.subr.mxu0 0.0
    %1446 = vmatpush2.msra.mxu0 0.0
    %1447 = vmatprep.subr.mxu0 0.0
    %1448 = vmatpush2.msra.mxu0 0.0
    %1449 = vmatprep.subr.mxu0 0.0
    %1450 = vmatpush2.msra.mxu0 0.0
    %1451 = vmatprep.subr.mxu0 0.0
    %1452 = vmatpush2.msra.mxu0 0.0
    %1453 = vmatprep.subr.mxu0 0.0
    %1454 = vmatpush2.msra.mxu0 0.0
    %1455 = vmatprep.subr.mxu0 0.0
    %1456 = vmatpush2.msra.mxu0 0.0
    %1457 = vmatprep.subr.mxu0 0.0
    %1458 = vmatpush2.msra.mxu0 0.0
    %1459 = vmatprep.subr.mxu0 0.0
    %1460 = vmatpush2.msra.mxu0 0.0
    %1461 = vmatprep.subr.mxu0 0.0
    %1462 = vmatpush2.msra.mxu0 0.0
    %1463 = vmatprep.subr.mxu0 0.0
    %1464 = vmatpush2.msra.mxu0 0.0
    %1465 = vmatprep.subr.mxu0 0.0
    %1466 = vmatpush2.msra.mxu0 0.0
    %1467 = vmatprep.subr.mxu0 0.0
    %1468 = vmatpush2.msra.mxu0 0.0
    %1469 = vmatprep.subr.mxu0 0.0
    %1470 = vmatpush2.msra.mxu0 0.0
    %1471 = vmatprep.subr.mxu0 0.0
    %1472 = vmatpush2.msra.mxu0 0.0
    %1473 = vmatprep.subr.mxu0 0.0
    %1474 = vmatpush2.msra.mxu0 0.0
    %1475 = vmatprep.subr.mxu0 0.0
    %1476 = vmatpush2.msra.mxu0 0.0
    %1477 = vmatprep.mubr.f32.mxu0 0.0
    %1478 = vmatmul.mubr.f32.gmra.mxu0 %v1408
    %v1479 = vpop.f32.mrf.mxu0
    %v1480 = vadd.f32 0.0, %v1479
    %v1481 = vpop.f32.mrf.mxu0
    %1482 = vmatprep.mubr.f32.mxu0 0.0
    %1483 = vmatmul.mubr.f32.gmra.mxu0 %v1411
    %v1484 = vpop.f32.mrf.mxu0
    %v1485 = vadd.f32 0.0, %v1484
    %v1486 = vpop.f32.mrf.mxu0
    %1487 = vdwg.mxu0
    %s1488 = scalar_lea.vmem %s3, 72
    %v1489 = vld [vmem:[%s1488] sm:$0xff]
    %v1490 = vld [vmem:[%s1488 + $0x8] sm:$0xff]
    %v1491 = vld [vmem:[%s1488 + $0x10] sm:$0xff]
    %s1492 = scalar_lea.vmem %s4, 3
    %v1493 = vld [vmem:[%s1492] sm:$0x1]
    %v1495 = vlaneseq
    %v1496 = vshrl.u32 %v1495, 7
    %v1497 = vsub.s32 0, %v1496
    %v1498 = vrot.slane %v1493, %v1497
    %1500 = vmatprep.subr.mxu0 0.0
    %1501 = vmatpush1.msra.mxu0 0.0
    %1502 = vmatprep.subr.mxu0 0.0
    %1503 = vmatpush1.msra.mxu0 0.0
    %1504 = vmatprep.subr.mxu0 0.0
    %1505 = vmatpush1.msra.mxu0 0.0
    %1506 = vmatprep.subr.mxu0 0.0
    %1507 = vmatpush1.msra.mxu0 0.0
    %1508 = vmatprep.subr.mxu0 0.0
    %1509 = vmatpush1.msra.mxu0 0.0
    %1510 = vmatprep.subr.mxu0 0.0
    %1511 = vmatpush1.msra.mxu0 0.0
    %1512 = vmatprep.subr.mxu0 0.0
    %1513 = vmatpush1.msra.mxu0 0.0
    %1514 = vmatprep.subr.mxu0 0.0
    %1515 = vmatpush1.msra.mxu0 0.0
    %1516 = vmatprep.subr.mxu0 0.0
    %1517 = vmatpush1.msra.mxu0 0.0
    %1518 = vmatprep.subr.mxu0 0.0
    %1519 = vmatpush1.msra.mxu0 0.0
    %1520 = vmatprep.subr.mxu0 0.0
    %1521 = vmatpush1.msra.mxu0 0.0
    %1522 = vmatprep.subr.mxu0 0.0
    %1523 = vmatpush1.msra.mxu0 0.0
    %1524 = vmatprep.subr.mxu0 0.0
    %1525 = vmatpush1.msra.mxu0 0.0
    %1526 = vmatprep.subr.mxu0 0.0
    %1527 = vmatpush1.msra.mxu0 %v1491
    %1528 = vmatprep.subr.mxu0 0.0
    %1529 = vmatpush1.msra.mxu0 %v1490
    %1530 = vmatprep.subr.mxu0 0.0
    %1531 = vmatpush1.msra.mxu0 %v1489
    %1532 = vmatprep.subr.mxu0 0.0
    %1533 = vmatpush2.msra.mxu0 0.0
    %1534 = vmatprep.subr.mxu0 0.0
    %1535 = vmatpush2.msra.mxu0 0.0
    %1536 = vmatprep.subr.mxu0 0.0
    %1537 = vmatpush2.msra.mxu0 0.0
    %1538 = vmatprep.subr.mxu0 0.0
    %1539 = vmatpush2.msra.mxu0 0.0
    %1540 = vmatprep.subr.mxu0 0.0
    %1541 = vmatpush2.msra.mxu0 0.0
    %1542 = vmatprep.subr.mxu0 0.0
    %1543 = vmatpush2.msra.mxu0 0.0
    %1544 = vmatprep.subr.mxu0 0.0
    %1545 = vmatpush2.msra.mxu0 0.0
    %1546 = vmatprep.subr.mxu0 0.0
    %1547 = vmatpush2.msra.mxu0 0.0
    %1548 = vmatprep.subr.mxu0 0.0
    %1549 = vmatpush2.msra.mxu0 0.0
    %1550 = vmatprep.subr.mxu0 0.0
    %1551 = vmatpush2.msra.mxu0 0.0
    %1552 = vmatprep.subr.mxu0 0.0
    %1553 = vmatpush2.msra.mxu0 0.0
    %1554 = vmatprep.subr.mxu0 0.0
    %1555 = vmatpush2.msra.mxu0 0.0
    %1556 = vmatprep.subr.mxu0 0.0
    %1557 = vmatpush2.msra.mxu0 0.0
    %1558 = vmatprep.subr.mxu0 0.0
    %1559 = vmatpush2.msra.mxu0 0.0
    %1560 = vmatprep.subr.mxu0 0.0
    %1561 = vmatpush2.msra.mxu0 0.0
    %1562 = vmatprep.subr.mxu0 0.0
    %1563 = vmatpush2.msra.mxu0 0.0
    %1564 = vmatprep.mubr.f32.mxu0 0.0
    %1565 = vmatmul.mubr.f32.gmra.mxu0 %v59
    %v1566 = vpop.f32.mrf.mxu0
    %v1567 = vadd.f32 %v1498, %v1566
    %v1568 = vpop.f32.mrf.mxu0
    %1569 = vmatprep.mubr.f32.mxu0 0.0
    %1570 = vmatmul.mubr.f32.gmra.mxu0 %v62
    %v1571 = vpop.f32.mrf.mxu0
    %v1572 = vadd.f32 %v1498, %v1571
    %v1573 = vpop.f32.mrf.mxu0
    %1574 = vdwg.mxu0
    %s1575 = scalar_lea.vmem %s5, 48
    %v1576 = vld [vmem:[%s1575] sm:$0xff]
    %v1577 = vld [vmem:[%s1575 + $0x8] sm:$0xff]
    %s1578 = scalar_lea.vmem %s6, 3
    %v1579 = vld [vmem:[%s1578] sm:$0x1]
    %v1581 = vlaneseq
    %v1582 = vshrl.u32 %v1581, 7
    %v1583 = vsub.s32 0, %v1582
    %v1584 = vrot.slane %v1579, %v1583
    %1586 = vmatprep.subr.mxu0 0.0
    %1587 = vmatpush1.msra.mxu0 0.0
    %1588 = vmatprep.subr.mxu0 0.0
    %1589 = vmatpush1.msra.mxu0 0.0
    %1590 = vmatprep.subr.mxu0 0.0
    %1591 = vmatpush1.msra.mxu0 0.0
    %1592 = vmatprep.subr.mxu0 0.0
    %1593 = vmatpush1.msra.mxu0 0.0
    %1594 = vmatprep.subr.mxu0 0.0
    %1595 = vmatpush1.msra.mxu0 0.0
    %1596 = vmatprep.subr.mxu0 0.0
    %1597 = vmatpush1.msra.mxu0 0.0
    %1598 = vmatprep.subr.mxu0 0.0
    %1599 = vmatpush1.msra.mxu0 0.0
    %1600 = vmatprep.subr.mxu0 0.0
    %1601 = vmatpush1.msra.mxu0 0.0
    %1602 = vmatprep.subr.mxu0 0.0
    %1603 = vmatpush1.msra.mxu0 0.0
    %1604 = vmatprep.subr.mxu0 0.0
    %1605 = vmatpush1.msra.mxu0 0.0
    %1606 = vmatprep.subr.mxu0 0.0
    %1607 = vmatpush1.msra.mxu0 0.0
    %1608 = vmatprep.subr.mxu0 0.0
    %1609 = vmatpush1.msra.mxu0 0.0
    %1610 = vmatprep.subr.mxu0 0.0
    %1611 = vmatpush1.msra.mxu0 0.0
    %1612 = vmatprep.subr.mxu0 0.0
    %1613 = vmatpush1.msra.mxu0 0.0
    %1614 = vmatprep.subr.mxu0 0.0
    %1615 = vmatpush1.msra.mxu0 %v1577
    %1616 = vmatprep.subr.mxu0 0.0
    %1617 = vmatpush1.msra.mxu0 %v1576
    %1618 = vmatprep.subr.mxu0 0.0
    %1619 = vmatpush2.msra.mxu0 0.0
    %1620 = vmatprep.subr.mxu0 0.0
    %1621 = vmatpush2.msra.mxu0 0.0
    %1622 = vmatprep.subr.mxu0 0.0
    %1623 = vmatpush2.msra.mxu0 0.0
    %1624 = vmatprep.subr.mxu0 0.0
    %1625 = vmatpush2.msra.mxu0 0.0
    %1626 = vmatprep.subr.mxu0 0.0
    %1627 = vmatpush2.msra.mxu0 0.0
    %1628 = vmatprep.subr.mxu0 0.0
    %1629 = vmatpush2.msra.mxu0 0.0
    %1630 = vmatprep.subr.mxu0 0.0
    %1631 = vmatpush2.msra.mxu0 0.0
    %1632 = vmatprep.subr.mxu0 0.0
    %1633 = vmatpush2.msra.mxu0 0.0
    %1634 = vmatprep.subr.mxu0 0.0
    %1635 = vmatpush2.msra.mxu0 0.0
    %1636 = vmatprep.subr.mxu0 0.0
    %1637 = vmatpush2.msra.mxu0 0.0
    %1638 = vmatprep.subr.mxu0 0.0
    %1639 = vmatpush2.msra.mxu0 0.0
    %1640 = vmatprep.subr.mxu0 0.0
    %1641 = vmatpush2.msra.mxu0 0.0
    %1642 = vmatprep.subr.mxu0 0.0
    %1643 = vmatpush2.msra.mxu0 0.0
    %1644 = vmatprep.subr.mxu0 0.0
    %1645 = vmatpush2.msra.mxu0 0.0
    %1646 = vmatprep.subr.mxu0 0.0
    %1647 = vmatpush2.msra.mxu0 0.0
    %1648 = vmatprep.subr.mxu0 0.0
    %1649 = vmatpush2.msra.mxu0 0.0
    %1650 = vmatprep.mubr.f32.mxu0 0.0
    %1651 = vmatmul.mubr.f32.gmra.mxu0 %v150
    %v1652 = vpop.f32.mrf.mxu0
    %v1653 = vadd.f32 %v1584, %v1652
    %v1654 = vpop.f32.mrf.mxu0
    %1655 = vmatprep.mubr.f32.mxu0 0.0
    %1656 = vmatmul.mubr.f32.gmra.mxu0 %v153
    %v1657 = vpop.f32.mrf.mxu0
    %v1658 = vadd.f32 %v1584, %v1657
    %v1659 = vpop.f32.mrf.mxu0
    %1660 = vmatprep.mubr.f32.mxu0 0.0
    %1661 = vmatmul.mubr.f32.gmra.mxu0 %v156
    %v1662 = vpop.f32.mrf.mxu0
    %v1663 = vadd.f32 %v1584, %v1662
    %v1664 = vpop.f32.mrf.mxu0
    %1665 = vmatprep.mubr.f32.mxu0 0.0
    %1666 = vmatmul.mubr.f32.gmra.mxu0 %v159
    %v1667 = vpop.f32.mrf.mxu0
    %v1668 = vadd.f32 %v1584, %v1667
    %v1669 = vpop.f32.mrf.mxu0
    %1670 = vdwg.mxu0
    %s1671 = scalar_lea.vmem %s7, 48
    %v1672 = vld [vmem:[%s1671] sm:$0xff]
    %v1673 = vld [vmem:[%s1671 + $0x8] sm:$0xff]
    %s1674 = scalar_lea.vmem %s8, 3
    %v1675 = vld [vmem:[%s1674] sm:$0x1]
    %v1677 = vlaneseq
    %v1678 = vshrl.u32 %v1677, 7
    %v1679 = vsub.s32 0, %v1678
    %v1680 = vrot.slane %v1675, %v1679
    %1682 = vmatprep.subr.mxu0 0.0
    %1683 = vmatpush1.msra.mxu0 0.0
    %1684 = vmatprep.subr.mxu0 0.0
    %1685 = vmatpush1.msra.mxu0 0.0
    %1686 = vmatprep.subr.mxu0 0.0
    %1687 = vmatpush1.msra.mxu0 0.0
    %1688 = vmatprep.subr.mxu0 0.0
    %1689 = vmatpush1.msra.mxu0 0.0
    %1690 = vmatprep.subr.mxu0 0.0
    %1691 = vmatpush1.msra.mxu0 0.0
    %1692 = vmatprep.subr.mxu0 0.0
    %1693 = vmatpush1.msra.mxu0 0.0
    %1694 = vmatprep.subr.mxu0 0.0
    %1695 = vmatpush1.msra.mxu0 0.0
    %1696 = vmatprep.subr.mxu0 0.0
    %1697 = vmatpush1.msra.mxu0 0.0
    %1698 = vmatprep.subr.mxu0 0.0
    %1699 = vmatpush1.msra.mxu0 0.0
    %1700 = vmatprep.subr.mxu0 0.0
    %1701 = vmatpush1.msra.mxu0 0.0
    %1702 = vmatprep.subr.mxu0 0.0
    %1703 = vmatpush1.msra.mxu0 0.0
    %1704 = vmatprep.subr.mxu0 0.0
    %1705 = vmatpush1.msra.mxu0 0.0
    %1706 = vmatprep.subr.mxu0 0.0
    %1707 = vmatpush1.msra.mxu0 0.0
    %1708 = vmatprep.subr.mxu0 0.0
    %1709 = vmatpush1.msra.mxu0 0.0
    %1710 = vmatprep.subr.mxu0 0.0
    %1711 = vmatpush1.msra.mxu0 %v1673
    %1712 = vmatprep.subr.mxu0 0.0
    %1713 = vmatpush1.msra.mxu0 %v1672
    %1714 = vmatprep.subr.mxu0 0.0
    %1715 = vmatpush2.msra.mxu0 0.0
    %1716 = vmatprep.subr.mxu0 0.0
    %1717 = vmatpush2.msra.mxu0 0.0
    %1718 = vmatprep.subr.mxu0 0.0
    %1719 = vmatpush2.msra.mxu0 0.0
    %1720 = vmatprep.subr.mxu0 0.0
    %1721 = vmatpush2.msra.mxu0 0.0
    %1722 = vmatprep.subr.mxu0 0.0
    %1723 = vmatpush2.msra.mxu0 0.0
    %1724 = vmatprep.subr.mxu0 0.0
    %1725 = vmatpush2.msra.mxu0 0.0
    %1726 = vmatprep.subr.mxu0 0.0
    %1727 = vmatpush2.msra.mxu0 0.0
    %1728 = vmatprep.subr.mxu0 0.0
    %1729 = vmatpush2.msra.mxu0 0.0
    %1730 = vmatprep.subr.mxu0 0.0
    %1731 = vmatpush2.msra.mxu0 0.0
    %1732 = vmatprep.subr.mxu0 0.0
    %1733 = vmatpush2.msra.mxu0 0.0
    %1734 = vmatprep.subr.mxu0 0.0
    %1735 = vmatpush2.msra.mxu0 0.0
    %1736 = vmatprep.subr.mxu0 0.0
    %1737 = vmatpush2.msra.mxu0 0.0
    %1738 = vmatprep.subr.mxu0 0.0
    %1739 = vmatpush2.msra.mxu0 0.0
    %1740 = vmatprep.subr.mxu0 0.0
    %1741 = vmatpush2.msra.mxu0 0.0
    %1742 = vmatprep.subr.mxu0 0.0
    %1743 = vmatpush2.msra.mxu0 0.0
    %1744 = vmatprep.subr.mxu0 0.0
    %1745 = vmatpush2.msra.mxu0 0.0
    %1746 = vmatprep.mubr.f32.mxu0 0.0
    %1747 = vmatmul.mubr.f32.gmra.mxu0 %v150
    %v1748 = vpop.f32.mrf.mxu0
    %v1749 = vadd.f32 %v1680, %v1748
    %v1750 = vpop.f32.mrf.mxu0
    %1751 = vmatprep.mubr.f32.mxu0 0.0
    %1752 = vmatmul.mubr.f32.gmra.mxu0 %v153
    %v1753 = vpop.f32.mrf.mxu0
    %v1754 = vadd.f32 %v1680, %v1753
    %v1755 = vpop.f32.mrf.mxu0
    %1756 = vmatprep.mubr.f32.mxu0 0.0
    %1757 = vmatmul.mubr.f32.gmra.mxu0 %v156
    %v1758 = vpop.f32.mrf.mxu0
    %v1759 = vadd.f32 %v1680, %v1758
    %v1760 = vpop.f32.mrf.mxu0
    %1761 = vmatprep.mubr.f32.mxu0 0.0
    %1762 = vmatmul.mubr.f32.gmra.mxu0 %v159
    %v1763 = vpop.f32.mrf.mxu0
    %v1764 = vadd.f32 %v1680, %v1763
    %v1765 = vpop.f32.mrf.mxu0
    %1766 = vdwg.mxu0
    %v1768 = vsel %vm340, %v1567, 0
    %v1771 = vsel %vm340, %v1572, 0
    %v1774 = vsel %vm340, %v1653, 0
    %v1777 = vsel %vm340, %v1658, 0
    %v1780 = vsel %vm340, %v1663, 0
    %v1783 = vsel %vm340, %v1668, 0
    %1785 = vmatprep.subr.mxu0 0.0
    %1786 = vmatpush1.xpose.msra.mxu0 0.0
    %1787 = vmatprep.subr.mxu0 0.0
    %1788 = vmatpush1.xpose.msra.mxu0 0.0
    %1789 = vmatprep.subr.mxu0 0.0
    %1790 = vmatpush1.xpose.msra.mxu0 0.0
    %1791 = vmatprep.subr.mxu0 0.0
    %1792 = vmatpush1.xpose.msra.mxu0 0.0
    %1793 = vmatprep.subr.mxu0 0.0
    %1794 = vmatpush1.xpose.msra.mxu0 0.0
    %1795 = vmatprep.subr.mxu0 0.0
    %1796 = vmatpush1.xpose.msra.mxu0 0.0
    %1797 = vmatprep.subr.mxu0 0.0
    %1798 = vmatpush1.xpose.msra.mxu0 0.0
    %1799 = vmatprep.subr.mxu0 0.0
    %1800 = vmatpush1.xpose.msra.mxu0 0.0
    %1801 = vmatprep.subr.mxu0 0.0
    %1802 = vmatpush1.xpose.msra.mxu0 0.0
    %1803 = vmatprep.subr.mxu0 0.0
    %1804 = vmatpush1.xpose.msra.mxu0 0.0
    %1805 = vmatprep.subr.mxu0 0.0
    %1806 = vmatpush1.xpose.msra.mxu0 0.0
    %1807 = vmatprep.subr.mxu0 0.0
    %1808 = vmatpush1.xpose.msra.mxu0 0.0
    %1809 = vmatprep.subr.mxu0 0.0
    %1810 = vmatpush1.xpose.msra.mxu0 %v1783
    %1811 = vmatprep.subr.mxu0 0.0
    %1812 = vmatpush1.xpose.msra.mxu0 %v1780
    %1813 = vmatprep.subr.mxu0 0.0
    %1814 = vmatpush1.xpose.msra.mxu0 %v1777
    %1815 = vmatprep.subr.mxu0 0.0
    %1816 = vmatpush1.xpose.msra.mxu0 %v1774
    %1817 = vmatprep.subr.mxu0 0.0
    %1818 = vmatpush2.xpose.msra.mxu0 0.0
    %1819 = vmatprep.subr.mxu0 0.0
    %1820 = vmatpush2.xpose.msra.mxu0 0.0
    %1821 = vmatprep.subr.mxu0 0.0
    %1822 = vmatpush2.xpose.msra.mxu0 0.0
    %1823 = vmatprep.subr.mxu0 0.0
    %1824 = vmatpush2.xpose.msra.mxu0 0.0
    %1825 = vmatprep.subr.mxu0 0.0
    %1826 = vmatpush2.xpose.msra.mxu0 0.0
    %1827 = vmatprep.subr.mxu0 0.0
    %1828 = vmatpush2.xpose.msra.mxu0 0.0
    %1829 = vmatprep.subr.mxu0 0.0
    %1830 = vmatpush2.xpose.msra.mxu0 0.0
    %1831 = vmatprep.subr.mxu0 0.0
    %1832 = vmatpush2.xpose.msra.mxu0 0.0
    %1833 = vmatprep.subr.mxu0 0.0
    %1834 = vmatpush2.xpose.msra.mxu0 0.0
    %1835 = vmatprep.subr.mxu0 0.0
    %1836 = vmatpush2.xpose.msra.mxu0 0.0
    %1837 = vmatprep.subr.mxu0 0.0
    %1838 = vmatpush2.xpose.msra.mxu0 0.0
    %1839 = vmatprep.subr.mxu0 0.0
    %1840 = vmatpush2.xpose.msra.mxu0 0.0
    %1841 = vmatprep.subr.mxu0 0.0
    %1842 = vmatpush2.xpose.msra.mxu0 0.0
    %1843 = vmatprep.subr.mxu0 0.0
    %1844 = vmatpush2.xpose.msra.mxu0 0.0
    %1845 = vmatprep.subr.mxu0 0.0
    %1846 = vmatpush2.xpose.msra.mxu0 0.0
    %1847 = vmatprep.subr.mxu0 0.0
    %1848 = vmatpush2.xpose.msra.mxu0 0.0
    %1849 = vmatprep.mubr.f32.mxu0 0.0
    %1850 = vmatmul.mubr.f32.gmra.mxu0 %v1768
    %v1851 = vpop.f32.mrf.mxu0
    %v1852 = vadd.f32 %v45, %v1851
    %v1853 = vpop.f32.mrf.mxu0
    %1854 = vmatprep.mubr.f32.mxu0 0.0
    %1855 = vmatmul.mubr.f32.gmra.mxu0 %v1771
    %v1856 = vpop.f32.mrf.mxu0
    %v1857 = vadd.f32 %v46, %v1856
    %v1858 = vpop.f32.mrf.mxu0
    %1859 = vdwg.mxu0
    %v1860 = vsel %vm434, %v1852, -inf
    %1861 = vmax.xlane.f32.xlu0 %v1860
    %v1862 = vpop.xlane.xlu0 %1861
    %v1863 = vsel %vm434, %v1857, -inf
    %1864 = vmax.xlane.f32.xlu0 %v1863
    %v1865 = vpop.xlane.xlu0 %1864
    %v1866 = vsub.f32 %v1852, %v1862
    %v1867 = vsub.f32 %v1857, %v1865
    %v1868 = vmul.f32 %v1866, 1.442695
    %v1869 = vpow.pop %v1868
    %v1870 = vmul.f32 %v1867, 1.442695
    %v1871 = vpow.pop %v1870
    %v1872 = vsel %vm434, %v1869, 0.0
    %1873 = vadd.xlane.f32.xlu0 %v1872
    %v1874 = vpop.xlane.xlu0 %1873
    %v1875 = vsel %vm434, %v1871, 0.0
    %1876 = vadd.xlane.f32.xlu0 %v1875
    %v1877 = vpop.xlane.xlu0 %1876
    %v1878 = vrcp.pop %v1874
    %v1879 = vrcp.pop %v1877
    %v1880 = vmul.f32 %v1869, %v1878
    %v1881 = vmul.f32 %v1871, %v1879
    %v1883 = vsel %vm434, %v1880, 0
    %v1886 = vsel %vm434, %v1881, 0
    %1888 = vmatprep.subr.mxu0 0.0
    %1889 = vmatpush1.msra.mxu0 0.0
    %1890 = vmatprep.subr.mxu0 0.0
    %1891 = vmatpush1.msra.mxu0 0.0
    %1892 = vmatprep.subr.mxu0 0.0
    %1893 = vmatpush1.msra.mxu0 0.0
    %1894 = vmatprep.subr.mxu0 0.0
    %1895 = vmatpush1.msra.mxu0 0.0
    %1896 = vmatprep.subr.mxu0 0.0
    %1897 = vmatpush1.msra.mxu0 0.0
    %1898 = vmatprep.subr.mxu0 0.0
    %1899 = vmatpush1.msra.mxu0 0.0
    %1900 = vmatprep.subr.mxu0 0.0
    %1901 = vmatpush1.msra.mxu0 0.0
    %1902 = vmatprep.subr.mxu0 0.0
    %1903 = vmatpush1.msra.mxu0 0.0
    %1904 = vmatprep.subr.mxu0 0.0
    %1905 = vmatpush1.msra.mxu0 0.0
    %1906 = vmatprep.subr.mxu0 0.0
    %1907 = vmatpush1.msra.mxu0 0.0
    %1908 = vmatprep.subr.mxu0 0.0
    %1909 = vmatpush1.msra.mxu0 0.0
    %1910 = vmatprep.subr.mxu0 0.0
    %1911 = vmatpush1.msra.mxu0 0.0
    %1912 = vmatprep.subr.mxu0 0.0
    %1913 = vmatpush1.msra.mxu0 %v1764
    %1914 = vmatprep.subr.mxu0 0.0
    %1915 = vmatpush1.msra.mxu0 %v1759
    %1916 = vmatprep.subr.mxu0 0.0
    %1917 = vmatpush1.msra.mxu0 %v1754
    %1918 = vmatprep.subr.mxu0 0.0
    %1919 = vmatpush1.msra.mxu0 %v1749
    %1920 = vmatprep.subr.mxu0 0.0
    %1921 = vmatpush2.msra.mxu0 0.0
    %1922 = vmatprep.subr.mxu0 0.0
    %1923 = vmatpush2.msra.mxu0 0.0
    %1924 = vmatprep.subr.mxu0 0.0
    %1925 = vmatpush2.msra.mxu0 0.0
    %1926 = vmatprep.subr.mxu0 0.0
    %1927 = vmatpush2.msra.mxu0 0.0
    %1928 = vmatprep.subr.mxu0 0.0
    %1929 = vmatpush2.msra.mxu0 0.0
    %1930 = vmatprep.subr.mxu0 0.0
    %1931 = vmatpush2.msra.mxu0 0.0
    %1932 = vmatprep.subr.mxu0 0.0
    %1933 = vmatpush2.msra.mxu0 0.0
    %1934 = vmatprep.subr.mxu0 0.0
    %1935 = vmatpush2.msra.mxu0 0.0
    %1936 = vmatprep.subr.mxu0 0.0
    %1937 = vmatpush2.msra.mxu0 0.0
    %1938 = vmatprep.subr.mxu0 0.0
    %1939 = vmatpush2.msra.mxu0 0.0
    %1940 = vmatprep.subr.mxu0 0.0
    %1941 = vmatpush2.msra.mxu0 0.0
    %1942 = vmatprep.subr.mxu0 0.0
    %1943 = vmatpush2.msra.mxu0 0.0
    %1944 = vmatprep.subr.mxu0 0.0
    %1945 = vmatpush2.msra.mxu0 0.0
    %1946 = vmatprep.subr.mxu0 0.0
    %1947 = vmatpush2.msra.mxu0 0.0
    %1948 = vmatprep.subr.mxu0 0.0
    %1949 = vmatpush2.msra.mxu0 0.0
    %1950 = vmatprep.subr.mxu0 0.0
    %1951 = vmatpush2.msra.mxu0 0.0
    %1952 = vmatprep.mubr.f32.mxu0 0.0
    %1953 = vmatmul.mubr.f32.gmra.mxu0 %v1883
    %v1954 = vpop.f32.mrf.mxu0
    %v1955 = vadd.f32 0.0, %v1954
    %v1956 = vpop.f32.mrf.mxu0
    %1957 = vmatprep.mubr.f32.mxu0 0.0
    %1958 = vmatmul.mubr.f32.gmra.mxu0 %v1886
    %v1959 = vpop.f32.mrf.mxu0
    %v1960 = vadd.f32 0.0, %v1959
    %v1961 = vpop.f32.mrf.mxu0
    %1962 = vdwg.mxu0
    %1965 = vrot.lane.b32.xlu0 %v1005, 8
    %v1966 = vpop.permute.xlu0 %1965
    %1967 = vrot.lane.b32.xlu0 %v1010, 8
    %v1968 = vpop.permute.xlu0 %1967
    %1973 = vrot.lane.b32.xlu0 %v1480, 16
    %v1974 = vpop.permute.xlu0 %1973
    %1975 = vrot.lane.b32.xlu0 %v1485, 16
    %v1976 = vpop.permute.xlu0 %1975
    %1981 = vrot.lane.b32.xlu0 %v1955, 24
    %v1982 = vpop.permute.xlu0 %1981
    %1983 = vrot.lane.b32.xlu0 %v1960, 24
    %v1984 = vpop.permute.xlu0 %1983
    %v1987 = vsel %vm340, %v530, %v1966
    %v1988 = vsel %vm340, %v535, %v1968
    %v1989 = vsel %vm148, %v1987, %v1974
    %v1990 = vsel %vm148, %v1988, %v1976
    %v1991 = vsel %vm57, %v1989, %v1982
    %v1992 = vsel %vm57, %v1990, %v1984
    %v1993 = vld [vmem:[%s9] sm:$0xff]
    %v1994 = vld [vmem:[%s9 + $0x8] sm:$0xff]
    %v1995 = vld [vmem:[%s9 + $0x10] sm:$0xff]
    %v1996 = vld [vmem:[%s9 + $0x18] sm:$0xff]
    %v1997 = vld [vmem:[%s10] sm:$0x1]
    %v1999 = vlaneseq
    %v2000 = vshrl.u32 %v1999, 7
    %v2001 = vsub.s32 0, %v2000
    %v2002 = vrot.slane %v1997, %v2001
    %v2005 = vsel %vm434, %v1991, 0
    %v2008 = vsel %vm434, %v1992, 0
    %2010 = vmatprep.subr.mxu0 0.0
    %2011 = vmatpush1.msra.mxu0 0.0
    %2012 = vmatprep.subr.mxu0 0.0
    %2013 = vmatpush1.msra.mxu0 0.0
    %2014 = vmatprep.subr.mxu0 0.0
    %2015 = vmatpush1.msra.mxu0 0.0
    %2016 = vmatprep.subr.mxu0 0.0
    %2017 = vmatpush1.msra.mxu0 0.0
    %2018 = vmatprep.subr.mxu0 0.0
    %2019 = vmatpush1.msra.mxu0 0.0
    %2020 = vmatprep.subr.mxu0 0.0
    %2021 = vmatpush1.msra.mxu0 0.0
    %2022 = vmatprep.subr.mxu0 0.0
    %2023 = vmatpush1.msra.mxu0 0.0
    %2024 = vmatprep.subr.mxu0 0.0
    %2025 = vmatpush1.msra.mxu0 0.0
    %2026 = vmatprep.subr.mxu0 0.0
    %2027 = vmatpush1.msra.mxu0 0.0
    %2028 = vmatprep.subr.mxu0 0.0
    %2029 = vmatpush1.msra.mxu0 0.0
    %2030 = vmatprep.subr.mxu0 0.0
    %2031 = vmatpush1.msra.mxu0 0.0
    %2032 = vmatprep.subr.mxu0 0.0
    %2033 = vmatpush1.msra.mxu0 0.0
    %2034 = vmatprep.subr.mxu0 0.0
    %2035 = vmatpush1.msra.mxu0 %v1996
    %2036 = vmatprep.subr.mxu0 0.0
    %2037 = vmatpush1.msra.mxu0 %v1995
    %2038 = vmatprep.subr.mxu0 0.0
    %2039 = vmatpush1.msra.mxu0 %v1994
    %2040 = vmatprep.subr.mxu0 0.0
    %2041 = vmatpush1.msra.mxu0 %v1993
    %2042 = vmatprep.subr.mxu0 0.0
    %2043 = vmatpush2.msra.mxu0 0.0
    %2044 = vmatprep.subr.mxu0 0.0
    %2045 = vmatpush2.msra.mxu0 0.0
    %2046 = vmatprep.subr.mxu0 0.0
    %2047 = vmatpush2.msra.mxu0 0.0
    %2048 = vmatprep.subr.mxu0 0.0
    %2049 = vmatpush2.msra.mxu0 0.0
    %2050 = vmatprep.subr.mxu0 0.0
    %2051 = vmatpush2.msra.mxu0 0.0
    %2052 = vmatprep.subr.mxu0 0.0
    %2053 = vmatpush2.msra.mxu0 0.0
    %2054 = vmatprep.subr.mxu0 0.0
    %2055 = vmatpush2.msra.mxu0 0.0
    %2056 = vmatprep.subr.mxu0 0.0
    %2057 = vmatpush2.msra.mxu0 0.0
    %2058 = vmatprep.subr.mxu0 0.0
    %2059 = vmatpush2.msra.mxu0 0.0
    %2060 = vmatprep.subr.mxu0 0.0
    %2061 = vmatpush2.msra.mxu0 0.0
    %2062 = vmatprep.subr.mxu0 0.0
    %2063 = vmatpush2.msra.mxu0 0.0
    %2064 = vmatprep.subr.mxu0 0.0
    %2065 = vmatpush2.msra.mxu0 0.0
    %2066 = vmatprep.subr.mxu0 0.0
    %2067 = vmatpush2.msra.mxu0 0.0
    %2068 = vmatprep.subr.mxu0 0.0
    %2069 = vmatpush2.msra.mxu0 0.0
    %2070 = vmatprep.subr.mxu0 0.0
    %2071 = vmatpush2.msra.mxu0 0.0
    %2072 = vmatprep.subr.mxu0 0.0
    %2073 = vmatpush2.msra.mxu0 0.0
    %2074 = vmatprep.mubr.f32.mxu0 0.0
    %2075 = vmatmul.mubr.f32.gmra.mxu0 %v2005
    %v2076 = vpop.f32.mrf.mxu0
    %v2077 = vadd.f32 %v2002, %v2076
    %v2078 = vpop.f32.mrf.mxu0
    %2079 = vmatprep.mubr.f32.mxu0 0.0
    %2080 = vmatmul.mubr.f32.gmra.mxu0 %v2008
    %v2081 = vpop.f32.mrf.mxu0
    %v2082 = vadd.f32 %v2002, %v2081
    %v2083 = vpop.f32.mrf.mxu0
    %2084 = vdwg.mxu0
    %2085 = vst.msk [vmem:[#allocation2] sm:$0xff] %vm434, %v2077
    %2086 = vst.msk [vmem:[#allocation2 + $0x8] sm:$0xff] %vm434, %v2082
    // Predicated region
    $region46: #{tpu_custom_call.1} parent=1 // pred_check
      _
    $region47: #{tpu_custom_call.1} parent=1 // pred_check_branch
      %2088 = sbr.rel (0) target = $region49
    $region48: #{tpu_custom_call.1} parent=1 // pred_region
      %s2090 = ssub.s32 256, 256
      %2091 = vsyncadd [#allocation3], %s2090
      %s2092 = sshll.u32 [#allocation2], 4
      %s2093 = int_to_ptr.vmem [resolvable:$true] %s2092
      %2098 = dma.vmem_to_hbm [thread:$0]  %s2093, 256, %s11, [#allocation3], 128, 128, 8
    $region49: #{tpu_custom_call.1} parent=1 // pred_fallthru
      _
    // Predicated region
    $region50: #{tpu_custom_call.1} parent=1 // pred_check
      _
    $region51: #{tpu_custom_call.1} parent=1 // pred_check_branch
      %2100 = sbr.rel (0) target = $region53
    $region52: #{tpu_custom_call.1} parent=1 // pred_region
      %2101 = dma.done [#allocation3], 256
    $region53: #{tpu_custom_call.1} parent=1 // pred_fallthru
      _
    %2102 = vsyncpa [#allocation3], 1

</llo_original>
